<compile_context>
chip_gen: v7x
topology: tpu7x:2x2x1
jax: 0.10.0
libtpu: 0.0.40
codegen_flags: <defaults>
</compile_context>

<pallas_src>
import functools

import jax
import jax.numpy as jnp
from jax.experimental import pallas as pl
from jax.experimental.pallas import tpu as pltpu

T_BLK = 8  # timesteps per grid step (static unroll cap, see review item on vreg pressure)


def _round_up(x, m):
    return (x + m - 1) // m * m


def _tpu_kind():
    try:
        return jax.devices()[0].device_kind.lower()
    except Exception:
        return ""


def _choose_batch_blocking(batch):
    """Pick (padded batch, batch block) to fill the MXU rows and (on v7x) both cores."""
    kind = _tpu_kind()
    mxu_rows = 128 if "v5" in kind else 256       # v5e MXU is 128x128; v6e/v7x 256x256
    two_tensorcores = "v7" in kind                # v7x has 2 TCs per chip
    b8 = _round_up(batch, 8)
    if two_tensorcores and b8 >= 16:
        blk = min(_round_up((b8 + 1) // 2, 8), mxu_rows)   # 2 blocks -> both cores busy
    else:
        blk = min(b8, mxu_rows)
    bp = _round_up(b8, blk)
    return bp, blk


def _vmem_limit_bytes(t_blk, b_blk, hp, mm_bytes):
    f32 = 4
    blk_in = 2 * t_blk * b_blk * hp * f32              # double-buffered input block
    blk_out = 2 * t_blk * b_blk * hp * f32             # double-buffered output block
    blk_cn = 2 * b_blk * hp * f32
    blk_h0c0 = 2 * 2 * b_blk * hp * f32
    resident = 2 * hp * 4 * hp * mm_bytes + 4 * hp * f32   # wih + whh + bias (single copy)
    scratch = (2 * b_blk * hp + t_blk * b_blk * 4 * hp) * f32
    need = blk_in + blk_out + blk_cn + blk_h0c0 + resident + scratch
    return int(min(max(need * 3 // 2 + (2 << 20), 32 << 20), 100 << 20))


def _sigmoid(x):
    # sigmoid(x) == 0.5 * tanh(0.5 * x) + 0.5 : single EUP op per gate (vs exp + recip).
    return 0.5 * jnp.tanh(0.5 * x) + 0.5


# --------------------------- Pallas fused LSTM-layer kernel -------------------------
def _lstm_fused_kernel(x_ref, wih_ref, whh_ref, bias_ref, h0_ref, c0_ref,
                       out_ref, cN_ref, h_sc, c_sc, gx_sc,
                       *, hp, t_blk, b_blk, i_last):
    """One LSTM layer, one (batch_block, time_block) grid step.

    x_ref   : (t_blk, b_blk, hp)   layer input block (f32)
    wih_ref : (hp, 4*hp)           resident input-projection weight (transposed, padded)
    whh_ref : (hp, 4*hp)           resident recurrent weight (transposed, padded)
    bias_ref: (1, 4*hp)            fused b_ih + b_hh
    out_ref : (t_blk, b_blk, hp)   per-timestep hidden outputs
    h_sc/c_sc: (b_blk, hp)         recurrent state carried across time blocks
    gx_sc   : (t_blk*b_blk, 4*hp)  per-block input-projection result
    """
    tb = pl.program_id(1)  # time-block index (sequential / "arbitrary" axis)

    @pl.when(tb == 0)
    def _():
        h_sc[...] = h0_ref[...]
        c_sc[...] = c0_ref[...]

    mm_dtype = wih_ref.dtype

    # Fused input projection for the whole time block: one MXU matmul with
    # M = t_blk * b_blk rows (instead of streaming a 4x-wide gates_x array from HBM).
    x2d = x_ref[...].reshape(t_blk * b_blk, hp).astype(mm_dtype)
    gx_sc[...] = (jnp.dot(x2d, wih_ref[...], preferred_element_type=jnp.float32)
                  + bias_ref[...])

    whh = whh_ref[...]
    h = h_sc[...]
    c = c_sc[...]
    c_last = c

    # Statically unrolled recurrence over the time block (t_blk == 8).
    for i in range(t_blk):
        gates = (gx_sc[i * b_blk:(i + 1) * b_blk, :]
                 + jnp.dot(h.astype(mm_dtype), whh,
                           preferred_element_type=jnp.float32))
        # PyTorch gate order i, f, g, o; each gate is a 128-aligned hp-wide block.
        i_g = _sigmoid(gates[:, 0 * hp:1 * hp])
        f_g = _sigmoid(gates[:, 1 * hp:2 * hp])
        g_g = jnp.tanh(gates[:, 2 * hp:3 * hp])
        o_g = _sigmoid(gates[:, 3 * hp:4 * hp])
        c = f_g * c + i_g * g_g
        h = o_g * jnp.tanh(c)
        out_ref[i] = h
        if i == i_last:          # static position of the last REAL timestep
            c_last = c

    h_sc[...] = h
    c_sc[...] = c

    @pl.when(tb == pl.num_programs(1) - 1)
    def _():
        cN_ref[...] = c_last     # cell state at the last real step (ignores time padding)


def lstm_layer_pallas(layer_in, wih_t, whh_t, bias, h0, c0, *, seq_len, t_blk, b_blk):
    """layer_in: (Sp, Bp, Hp) f32; wih_t/whh_t: (Hp, 4Hp); bias: (1, 4Hp); h0/c0: (Bp, Hp)."""
    Sp, Bp, Hp = layer_in.shape
    n_b = Bp // b_blk
    n_t = Sp // t_blk
    i_last = (seq_len - 1) % t_blk
    mm_bytes = jnp.dtype(wih_t.dtype).itemsize

    kernel = functools.partial(_lstm_fused_kernel, hp=Hp, t_blk=t_blk,
                               b_blk=b_blk, i_last=i_last)

    out, cN = pl.pallas_call(
        kernel,
        out_shape=(
            jax.ShapeDtypeStruct((Sp, Bp, Hp), jnp.float32),
            jax.ShapeDtypeStruct((Bp, Hp), jnp.float32),
        ),
        grid_spec=pltpu.PrefetchScalarGridSpec(
            num_scalar_prefetch=0,
            grid=(n_b, n_t),
            in_specs=[
                # layer input, blocked over (time, batch)
                pl.BlockSpec((t_blk, b_blk, Hp), lambda b, t: (t, b, 0)),
                # resident weights / bias: whole array in VMEM, single-buffered
                pl.BlockSpec(memory_space=pltpu.MemorySpace.VMEM),
                pl.BlockSpec(memory_space=pltpu.MemorySpace.VMEM),
                pl.BlockSpec(memory_space=pltpu.MemorySpace.VMEM),
                # initial state for this batch block
                pl.BlockSpec((b_blk, Hp), lambda b, t: (b, 0)),
                pl.BlockSpec((b_blk, Hp), lambda b, t: (b, 0)),
            ],
            out_specs=(
                pl.BlockSpec((t_blk, b_blk, Hp), lambda b, t: (t, b, 0)),
                pl.BlockSpec((b_blk, Hp), lambda b, t: (b, 0)),   # final c (last write)
            ),
            scratch_shapes=[
                pltpu.VMEM((b_blk, Hp), jnp.float32),                 # h state
                pltpu.VMEM((b_blk, Hp), jnp.float32),                 # c state
                pltpu.VMEM((t_blk * b_blk, 4 * Hp), jnp.float32),     # per-block gates_x
            ],
        ),
        compiler_params=pltpu.CompilerParams(
            dimension_semantics=("parallel", "arbitrary"),
            vmem_limit_bytes=_vmem_limit_bytes(t_blk, b_blk, Hp, mm_bytes)),
    )(layer_in, wih_t, whh_t, bias, h0, c0)
    return out, cN


# ------------------------------- parameters -----------------------------------------
def init_encoder_params(key, input_size, hidden_size, num_layers):
    """PyTorch-layout parameters (used by the reference implementation)."""
    params = {}
    k = 1.0 / jnp.sqrt(jnp.float32(hidden_size))
    key, sub = jax.random.split(key)
    params["embedding"] = jax.random.normal(sub, (input_size, hidden_size), jnp.float32)
    for l in range(num_layers):
        for name, shape in [
            (f"w_ih_{l}", (4 * hidden_size, hidden_size)),
            (f"w_hh_{l}", (4 * hidden_size, hidden_size)),
            (f"b_ih_{l}", (4 * hidden_size,)),
            (f"b_hh_{l}", (4 * hidden_size,)),
        ]:
            key, sub = jax.random.split(key)
            params[name] = jax.random.uniform(sub, shape, jnp.float32,
                                              minval=-k, maxval=k)
    return params


def prepare_encoder_params(params, hidden_size, num_layers, mm_dtype=jnp.bfloat16):
    """One-time prep: transpose weights, pad each gate block to 128 lanes, fuse biases,
    and cast the matmul weights to `mm_dtype` (bf16 by default; f32 accumulation)."""
    H = hidden_size
    Hp = _round_up(H, 128)
    prep = {"H": H, "Hp": Hp}
    prep["embedding"] = jnp.pad(params["embedding"],
                                ((0, 0), (0, Hp - H))).astype(jnp.float32)
    for l in range(num_layers):
        # (4H, H) -> (H, 4H) -> (H, 4, H) -> zero-pad -> (Hp, 4*Hp); gate order i,f,g,o.
        # Zero-padded rows/cols keep the padded hidden lanes out of the real results.
        wih_t = params[f"w_ih_{l}"].T.reshape(H, 4, H)
        whh_t = params[f"w_hh_{l}"].T.reshape(H, 4, H)
        wih_t = jnp.pad(wih_t, ((0, Hp - H), (0, 0), (0, Hp - H))).reshape(Hp, 4 * Hp)
        whh_t = jnp.pad(whh_t, ((0, Hp - H), (0, 0), (0, Hp - H))).reshape(Hp, 4 * Hp)
        bias = (params[f"b_ih_{l}"] + params[f"b_hh_{l}"]).reshape(4, H)
        bias = jnp.pad(bias, ((0, 0), (0, Hp - H))).reshape(1, 4 * Hp)
        prep[f"wih_t_{l}"] = wih_t.astype(mm_dtype)
        prep[f"whh_t_{l}"] = whh_t.astype(mm_dtype)
        prep[f"bias_{l}"] = bias.astype(jnp.float32)
    return prep


# -------------------------------- forward pass ---------------------------------------
def encoder_forward(prep, x, hidden, num_layers):
    """x: (S, B) int32 token ids; hidden: (h0, c0) each (L, B, H)."""
    h0, c0 = hidden
    L, B, H = h0.shape
    S = x.shape[0]
    Hp = prep["Hp"]
    Bp, b_blk = _choose_batch_blocking(B)
    Sp = _round_up(S, T_BLK)

    # Embedding gather (padded table -> lane-dense activations); plain-JAX glue.
    emb = jnp.take(prep["embedding"], x, axis=0)                        # (S, B, Hp)
    layer_in = jnp.pad(emb, ((0, Sp - S), (0, Bp - B), (0, 0)))         # (Sp, Bp, Hp)

    h0p = jnp.pad(h0, ((0, 0), (0, Bp - B), (0, Hp - H)))               # (L, Bp, Hp)
    c0p = jnp.pad(c0, ((0, 0), (0, Bp - B), (0, Hp - H)))

    h_list, c_list = [], []
    for l in range(num_layers):
        out, cN = lstm_layer_pallas(layer_in, prep[f"wih_t_{l}"], prep[f"whh_t_{l}"],
                                    prep[f"bias_{l}"], h0p[l], c0p[l],
                                    seq_len=S, t_blk=T_BLK, b_blk=b_blk)
        layer_in = out
        h_list.append(out[S - 1, :B, :H])    # final h == output at last real timestep
        c_list.append(cN[:B, :H])

    outputs = layer_in[:S, :B, :H]
    return outputs, (jnp.stack(h_list, axis=0), jnp.stack(c_list, axis=0))


# ----------------------- pure-JAX reference (correctness check) ----------------------
def _lstm_layer_ref(x_seq, w_ih, w_hh, b_ih, b_hh, h0, c0):
    H = h0.shape[-1]

    def step(carry, x_t):
        h, c = carry
        gates = x_t @ w_ih.T + h @ w_hh.T + b_ih + b_hh
        i = jax.nn.sigmoid(gates[:, 0 * H:1 * H])
        f = jax.nn.sigmoid(gates[:, 1 * H:2 * H])
        g = jnp.tanh(gates[:, 2 * H:3 * H])
        o = jax.nn.sigmoid(gates[:, 3 * H:4 * H])
        c_new = f * c + i * g
        h_new = o * jnp.tanh(c_new)
        return (h_new, c_new), h_new

    (hT, cT), out = jax.lax.scan(step, (h0, c0), x_seq)
    return out, hT, cT


def encoder_forward_ref(params, x, hidden, num_layers):
    h0, c0 = hidden
    layer_in = jnp.take(params["embedding"], x, axis=0)
    h_list, c_list = [], []
    for l in range(num_layers):
        layer_in, hT, cT = _lstm_layer_ref(
            layer_in, params[f"w_ih_{l}"], params[f"w_hh_{l}"],
            params[f"b_ih_{l}"], params[f"b_hh_{l}"], h0[l], c0[l])
        h_list.append(hT)
        c_list.append(cT)
    return layer_in, (jnp.stack(h_list), jnp.stack(c_list))


if __name__ == "__main__":
    input_size = 16     # vocab size
    hidden_size = 32
    num_layers = 2
    seq_len = 8
    batch_size = 4

    key = jax.random.PRNGKey(0)
    key, pkey, xkey = jax.random.split(key, 3)

    params = init_encoder_params(pkey, input_size, hidden_size, num_layers)

    x = jax.random.randint(xkey, (seq_len, batch_size), 0, input_size, dtype=jnp.int32)
    hidden = (jnp.zeros((num_layers, batch_size, hidden_size), jnp.float32),
              jnp.zeros((num_layers, batch_size, hidden_size), jnp.float32))

    ref_out, (ref_h, ref_c) = encoder_forward_ref(params, x, hidden, num_layers)

    # ---- f32 matmul path: tight-tolerance correctness check -------------------------
    prep32 = prepare_encoder_params(params, hidden_size, num_layers, mm_dtype=jnp.float32)
    out32, (h32, c32) = encoder_forward(prep32, x, hidden, num_layers)
    out32 = jax.block_until_ready(out32)
    h32 = jax.block_until_ready(h32)
    c32 = jax.block_until_ready(c32)
    assert out32.shape == (seq_len, batch_size, hidden_size)
    assert h32.shape == (num_layers, batch_size, hidden_size)
    assert c32.shape == (num_layers, batch_size, hidden_size)
    assert jnp.allclose(out32, ref_out, atol=5e-5, rtol=5e-5)
    assert jnp.allclose(h32, ref_h, atol=5e-5, rtol=5e-5)
    assert jnp.allclose(c32, ref_c, atol=5e-5, rtol=5e-5)

    # ---- bf16 matmul path (default perf config): f32 accumulation, looser tolerance --
    prep16 = prepare_encoder_params(params, hidden_size, num_layers, mm_dtype=jnp.bfloat16)
    out16, (h16, c16) = encoder_forward(prep16, x, hidden, num_layers)
    out16 = jax.block_until_ready(out16)
    h16 = jax.block_until_ready(h16)
    c16 = jax.block_until_ready(c16)
    assert jnp.allclose(out16, ref_out, atol=5e-2, rtol=5e-2)
    assert jnp.allclose(h16, ref_h, atol=5e-2, rtol=5e-2)
    assert jnp.allclose(c16, ref_c, atol=5e-2, rtol=5e-2)

    print("KERNEL_OK")
</pallas_src>

<mosaic_0001>
module attributes {stable_mosaic.version = 11 : i64} {
  func.func @_lstm_fused_kernel(%arg0: i32, %arg1: i32, %arg2: memref<8x8x128xf32, #tpu.memory_space<vmem>>, %arg3: memref<128x512xf32, #tpu.memory_space<vmem>>, %arg4: memref<128x512xf32, #tpu.memory_space<vmem>>, %arg5: memref<1x512xf32, #tpu.memory_space<vmem>>, %arg6: memref<8x128xf32, #tpu.memory_space<vmem>>, %arg7: memref<8x128xf32, #tpu.memory_space<vmem>>, %arg8: memref<8x8x128xf32, #tpu.memory_space<vmem>>, %arg9: memref<8x128xf32, #tpu.memory_space<vmem>>, %arg10: memref<8x128xf32, #tpu.memory_space<vmem>>, %arg11: memref<8x128xf32, #tpu.memory_space<vmem>>, %arg12: memref<64x512xf32, #tpu.memory_space<vmem>>) attributes {dimension_semantics = [#tpu.dimension_semantics<parallel>, #tpu.dimension_semantics<arbitrary>], iteration_bounds = array<i64: 1, 1>, scalar_prefetch = 0 : i64, scratch_operands = 3 : i64, tpu.core_type = #tpu.core_type<tc>, window_params = [{transform_indices = @transform_0, window_bounds = array<i64: 8, 8, 128>}, {pipeline_mode = #tpu.pipeline_mode<synchronous>, transform_indices = @transform_1, window_bounds = array<i64: 128, 512>}, {pipeline_mode = #tpu.pipeline_mode<synchronous>, transform_indices = @transform_2, window_bounds = array<i64: 128, 512>}, {pipeline_mode = #tpu.pipeline_mode<synchronous>, transform_indices = @transform_3, window_bounds = array<i64: 1, 512>}, {transform_indices = @transform_4, window_bounds = array<i64: 8, 128>}, {transform_indices = @transform_5, window_bounds = array<i64: 8, 128>}, {transform_indices = @transform_6, window_bounds = array<i64: 8, 8, 128>}, {transform_indices = @transform_7, window_bounds = array<i64: 8, 128>}]} {
    %c0_i32 = arith.constant 0 : i32
    %0 = arith.cmpi eq, %arg1, %c0_i32 : i32
    %1 = arith.extui %0 : i1 to i32
    %c0_i32_0 = arith.constant 0 : i32
    %2 = arith.cmpi ne, %1, %c0_i32_0 : i32
    scf.if %2 {
      %c0_127 = arith.constant 0 : index
      %c0_128 = arith.constant 0 : index
      %315 = vector.load %arg6[%c0_127, %c0_128] : memref<8x128xf32, #tpu.memory_space<vmem>>, vector<8x128xf32>
      %c0_129 = arith.constant 0 : index
      %c0_130 = arith.constant 0 : index
      %316 = vector.load %arg10[%c0_129, %c0_130] : memref<8x128xf32, #tpu.memory_space<vmem>>, vector<8x128xf32>
      tpu.vector_store %arg10[%c0_129, %c0_130], %315 {strides = array<i32>} : memref<8x128xf32, #tpu.memory_space<vmem>>, vector<8x128xf32>,
      %c0_131 = arith.constant 0 : index
      %c0_132 = arith.constant 0 : index
      %317 = vector.load %arg7[%c0_131, %c0_132] : memref<8x128xf32, #tpu.memory_space<vmem>>, vector<8x128xf32>
      %c0_133 = arith.constant 0 : index
      %c0_134 = arith.constant 0 : index
      %318 = vector.load %arg11[%c0_133, %c0_134] : memref<8x128xf32, #tpu.memory_space<vmem>>, vector<8x128xf32>
      tpu.vector_store %arg11[%c0_133, %c0_134], %317 {strides = array<i32>} : memref<8x128xf32, #tpu.memory_space<vmem>>, vector<8x128xf32>,
    } else {
    }
    %c0 = arith.constant 0 : index
    %c0_1 = arith.constant 0 : index
    %c0_2 = arith.constant 0 : index
    %3 = vector.load %arg2[%c0, %c0_1, %c0_2] : memref<8x8x128xf32, #tpu.memory_space<vmem>>, vector<8x8x128xf32>
    %4 = vector.shape_cast %3 : vector<8x8x128xf32> to vector<64x128xf32>
    %c0_3 = arith.constant 0 : index
    %c0_4 = arith.constant 0 : index
    %5 = vector.load %arg3[%c0_3, %c0_4] : memref<128x512xf32, #tpu.memory_space<vmem>>, vector<128x512xf32>
    %cst = arith.constant dense<0.000000e+00> : vector<64x512xf32>
    %6 = tpu.matmul %4, %5, %cst {dimension_numbers = #tpu.dot_dimension_numbers<[1], [0], [0], [1], [0, 0, 1, 1], [], []>} : vector<64x128xf32>, vector<128x512xf32>, vector<64x512xf32> -> vector<64x512xf32>
    %c0_5 = arith.constant 0 : index
    %c0_6 = arith.constant 0 : index
    %7 = vector.load %arg5[%c0_5, %c0_6] : memref<1x512xf32, #tpu.memory_space<vmem>>, vector<1x512xf32>
    %8 = vector.broadcast %7 : vector<1x512xf32> to vector<64x512xf32>
    %9 = arith.addf %6, %8 : vector<64x512xf32>
    %c0_7 = arith.constant 0 : index
    %c0_8 = arith.constant 0 : index
    %10 = vector.load %arg12[%c0_7, %c0_8] : memref<64x512xf32, #tpu.memory_space<vmem>>, vector<64x512xf32>
    tpu.vector_store %arg12[%c0_7, %c0_8], %9 {strides = array<i32>} : memref<64x512xf32, #tpu.memory_space<vmem>>, vector<64x512xf32>,
    %c0_9 = arith.constant 0 : index
    %c0_10 = arith.constant 0 : index
    %11 = vector.load %arg4[%c0_9, %c0_10] : memref<128x512xf32, #tpu.memory_space<vmem>>, vector<128x512xf32>
    %c0_11 = arith.constant 0 : index
    %c0_12 = arith.constant 0 : index
    %12 = vector.load %arg10[%c0_11, %c0_12] : memref<8x128xf32, #tpu.memory_space<vmem>>, vector<8x128xf32>
    %c0_13 = arith.constant 0 : index
    %c0_14 = arith.constant 0 : index
    %13 = vector.load %arg11[%c0_13, %c0_14] : memref<8x128xf32, #tpu.memory_space<vmem>>, vector<8x128xf32>
    %c0_15 = arith.constant 0 : index
    %c0_16 = arith.constant 0 : index
    %14 = vector.load %arg12[%c0_15, %c0_16] : memref<64x512xf32, #tpu.memory_space<vmem>>, vector<8x512xf32>
    %cst_17 = arith.constant dense<0.000000e+00> : vector<8x512xf32>
    %15 = tpu.matmul %12, %11, %cst_17 {dimension_numbers = #tpu.dot_dimension_numbers<[1], [0], [0], [1], [0, 0, 1, 1], [], []>} : vector<8x128xf32>, vector<128x512xf32>, vector<8x512xf32> -> vector<8x512xf32>
    %16 = arith.addf %14, %15 : vector<8x512xf32>
    %17 = vector.extract_strided_slice %16 {offsets = [0, 0], sizes = [8, 128], strides = [1, 1]} : vector<8x512xf32> to vector<8x128xf32>
    %cst_18 = arith.constant 5.000000e-01 : f32
    %18 = vector.broadcast %cst_18 : f32 to vector<8x128xf32>
    %19 = arith.mulf %18, %17 : vector<8x128xf32>
    %20 = math.tanh %19 : vector<8x128xf32>
    %cst_19 = arith.constant 5.000000e-01 : f32
    %21 = vector.broadcast %cst_19 : f32 to vector<8x128xf32>
    %22 = arith.mulf %21, %20 : vector<8x128xf32>
    %cst_20 = arith.constant 5.000000e-01 : f32
    %23 = vector.broadcast %cst_20 : f32 to vector<8x128xf32>
    %24 = arith.addf %22, %23 : vector<8x128xf32>
    %25 = vector.extract_strided_slice %16 {offsets = [0, 128], sizes = [8, 128], strides = [1, 1]} : vector<8x512xf32> to vector<8x128xf32>
    %cst_21 = arith.constant 5.000000e-01 : f32
    %26 = vector.broadcast %cst_21 : f32 to vector<8x128xf32>
    %27 = arith.mulf %26, %25 : vector<8x128xf32>
    %28 = math.tanh %27 : vector<8x128xf32>
    %cst_22 = arith.constant 5.000000e-01 : f32
    %29 = vector.broadcast %cst_22 : f32 to vector<8x128xf32>
    %30 = arith.mulf %29, %28 : vector<8x128xf32>
    %cst_23 = arith.constant 5.000000e-01 : f32
    %31 = vector.broadcast %cst_23 : f32 to vector<8x128xf32>
    %32 = arith.addf %30, %31 : vector<8x128xf32>
    %33 = vector.extract_strided_slice %16 {offsets = [0, 256], sizes = [8, 128], strides = [1, 1]} : vector<8x512xf32> to vector<8x128xf32>
    %34 = math.tanh %33 : vector<8x128xf32>
    %35 = vector.extract_strided_slice %16 {offsets = [0, 384], sizes = [8, 128], strides = [1, 1]} : vector<8x512xf32> to vector<8x128xf32>
    %cst_24 = arith.constant 5.000000e-01 : f32
    %36 = vector.broadcast %cst_24 : f32 to vector<8x128xf32>
    %37 = arith.mulf %36, %35 : vector<8x128xf32>
    %38 = math.tanh %37 : vector<8x128xf32>
    %cst_25 = arith.constant 5.000000e-01 : f32
    %39 = vector.broadcast %cst_25 : f32 to vector<8x128xf32>
    %40 = arith.mulf %39, %38 : vector<8x128xf32>
    %cst_26 = arith.constant 5.000000e-01 : f32
    %41 = vector.broadcast %cst_26 : f32 to vector<8x128xf32>
    %42 = arith.addf %40, %41 : vector<8x128xf32>
    %43 = arith.mulf %32, %13 : vector<8x128xf32>
    %44 = arith.mulf %24, %34 : vector<8x128xf32>
    %45 = arith.addf %43, %44 : vector<8x128xf32>
    %46 = math.tanh %45 : vector<8x128xf32>
    %47 = arith.mulf %42, %46 : vector<8x128xf32>
    %c0_27 = arith.constant 0 : index
    %c0_28 = arith.constant 0 : index
    %c0_29 = arith.constant 0 : index
    %48 = vector.load %arg8[%c0_27, %c0_28, %c0_29] : memref<8x8x128xf32, #tpu.memory_space<vmem>>, vector<1x8x128xf32>
    %49 = vector.shape_cast %48 : vector<1x8x128xf32> to vector<8x128xf32>
    %50 = vector.shape_cast %47 : vector<8x128xf32> to vector<1x8x128xf32>
    tpu.vector_store %arg8[%c0_27, %c0_28, %c0_29], %50 {strides = array<i32>} : memref<8x8x128xf32, #tpu.memory_space<vmem>>, vector<1x8x128xf32>,
    %c8 = arith.constant 8 : index
    %c0_30 = arith.constant 0 : index
    %51 = vector.load %arg12[%c8, %c0_30] : memref<64x512xf32, #tpu.memory_space<vmem>>, vector<8x512xf32>
    %cst_31 = arith.constant dense<0.000000e+00> : vector<8x512xf32>
    %52 = tpu.matmul %47, %11, %cst_31 {dimension_numbers = #tpu.dot_dimension_numbers<[1], [0], [0], [1], [0, 0, 1, 1], [], []>} : vector<8x128xf32>, vector<128x512xf32>, vector<8x512xf32> -> vector<8x512xf32>
    %53 = arith.addf %51, %52 : vector<8x512xf32>
    %54 = vector.extract_strided_slice %53 {offsets = [0, 0], sizes = [8, 128], strides = [1, 1]} : vector<8x512xf32> to vector<8x128xf32>
    %cst_32 = arith.constant 5.000000e-01 : f32
    %55 = vector.broadcast %cst_32 : f32 to vector<8x128xf32>
    %56 = arith.mulf %55, %54 : vector<8x128xf32>
    %57 = math.tanh %56 : vector<8x128xf32>
    %cst_33 = arith.constant 5.000000e-01 : f32
    %58 = vector.broadcast %cst_33 : f32 to vector<8x128xf32>
    %59 = arith.mulf %58, %57 : vector<8x128xf32>
    %cst_34 = arith.constant 5.000000e-01 : f32
    %60 = vector.broadcast %cst_34 : f32 to vector<8x128xf32>
    %61 = arith.addf %59, %60 : vector<8x128xf32>
    %62 = vector.extract_strided_slice %53 {offsets = [0, 128], sizes = [8, 128], strides = [1, 1]} : vector<8x512xf32> to vector<8x128xf32>
    %cst_35 = arith.constant 5.000000e-01 : f32
    %63 = vector.broadcast %cst_35 : f32 to vector<8x128xf32>
    %64 = arith.mulf %63, %62 : vector<8x128xf32>
    %65 = math.tanh %64 : vector<8x128xf32>
    %cst_36 = arith.constant 5.000000e-01 : f32
    %66 = vector.broadcast %cst_36 : f32 to vector<8x128xf32>
    %67 = arith.mulf %66, %65 : vector<8x128xf32>
    %cst_37 = arith.constant 5.000000e-01 : f32
    %68 = vector.broadcast %cst_37 : f32 to vector<8x128xf32>
    %69 = arith.addf %67, %68 : vector<8x128xf32>
    %70 = vector.extract_strided_slice %53 {offsets = [0, 256], sizes = [8, 128], strides = [1, 1]} : vector<8x512xf32> to vector<8x128xf32>
    %71 = math.tanh %70 : vector<8x128xf32>
    %72 = vector.extract_strided_slice %53 {offsets = [0, 384], sizes = [8, 128], strides = [1, 1]} : vector<8x512xf32> to vector<8x128xf32>
    %cst_38 = arith.constant 5.000000e-01 : f32
    %73 = vector.broadcast %cst_38 : f32 to vector<8x128xf32>
    %74 = arith.mulf %73, %72 : vector<8x128xf32>
    %75 = math.tanh %74 : vector<8x128xf32>
    %cst_39 = arith.constant 5.000000e-01 : f32
    %76 = vector.broadcast %cst_39 : f32 to vector<8x128xf32>
    %77 = arith.mulf %76, %75 : vector<8x128xf32>
    %cst_40 = arith.constant 5.000000e-01 : f32
    %78 = vector.broadcast %cst_40 : f32 to vector<8x128xf32>
    %79 = arith.addf %77, %78 : vector<8x128xf32>
    %80 = arith.mulf %69, %45 : vector<8x128xf32>
    %81 = arith.mulf %61, %71 : vector<8x128xf32>
    %82 = arith.addf %80, %81 : vector<8x128xf32>
    %83 = math.tanh %82 : vector<8x128xf32>
    %84 = arith.mulf %79, %83 : vector<8x128xf32>
    %c1 = arith.constant 1 : index
    %c0_41 = arith.constant 0 : index
    %c0_42 = arith.constant 0 : index
    %85 = vector.load %arg8[%c1, %c0_41, %c0_42] : memref<8x8x128xf32, #tpu.memory_space<vmem>>, vector<1x8x128xf32>
    %86 = vector.shape_cast %85 : vector<1x8x128xf32> to vector<8x128xf32>
    %87 = vector.shape_cast %84 : vector<8x128xf32> to vector<1x8x128xf32>
    tpu.vector_store %arg8[%c1, %c0_41, %c0_42], %87 {strides = array<i32>} : memref<8x8x128xf32, #tpu.memory_space<vmem>>, vector<1x8x128xf32>,
    %c16 = arith.constant 16 : index
    %c0_43 = arith.constant 0 : index
    %88 = vector.load %arg12[%c16, %c0_43] : memref<64x512xf32, #tpu.memory_space<vmem>>, vector<8x512xf32>
    %cst_44 = arith.constant dense<0.000000e+00> : vector<8x512xf32>
    %89 = tpu.matmul %84, %11, %cst_44 {dimension_numbers = #tpu.dot_dimension_numbers<[1], [0], [0], [1], [0, 0, 1, 1], [], []>} : vector<8x128xf32>, vector<128x512xf32>, vector<8x512xf32> -> vector<8x512xf32>
    %90 = arith.addf %88, %89 : vector<8x512xf32>
    %91 = vector.extract_strided_slice %90 {offsets = [0, 0], sizes = [8, 128], strides = [1, 1]} : vector<8x512xf32> to vector<8x128xf32>
    %cst_45 = arith.constant 5.000000e-01 : f32
    %92 = vector.broadcast %cst_45 : f32 to vector<8x128xf32>
    %93 = arith.mulf %92, %91 : vector<8x128xf32>
    %94 = math.tanh %93 : vector<8x128xf32>
    %cst_46 = arith.constant 5.000000e-01 : f32
    %95 = vector.broadcast %cst_46 : f32 to vector<8x128xf32>
    %96 = arith.mulf %95, %94 : vector<8x128xf32>
    %cst_47 = arith.constant 5.000000e-01 : f32
    %97 = vector.broadcast %cst_47 : f32 to vector<8x128xf32>
    %98 = arith.addf %96, %97 : vector<8x128xf32>
    %99 = vector.extract_strided_slice %90 {offsets = [0, 128], sizes = [8, 128], strides = [1, 1]} : vector<8x512xf32> to vector<8x128xf32>
    %cst_48 = arith.constant 5.000000e-01 : f32
    %100 = vector.broadcast %cst_48 : f32 to vector<8x128xf32>
    %101 = arith.mulf %100, %99 : vector<8x128xf32>
    %102 = math.tanh %101 : vector<8x128xf32>
    %cst_49 = arith.constant 5.000000e-01 : f32
    %103 = vector.broadcast %cst_49 : f32 to vector<8x128xf32>
    %104 = arith.mulf %103, %102 : vector<8x128xf32>
    %cst_50 = arith.constant 5.000000e-01 : f32
    %105 = vector.broadcast %cst_50 : f32 to vector<8x128xf32>
    %106 = arith.addf %104, %105 : vector<8x128xf32>
    %107 = vector.extract_strided_slice %90 {offsets = [0, 256], sizes = [8, 128], strides = [1, 1]} : vector<8x512xf32> to vector<8x128xf32>
    %108 = math.tanh %107 : vector<8x128xf32>
    %109 = vector.extract_strided_slice %90 {offsets = [0, 384], sizes = [8, 128], strides = [1, 1]} : vector<8x512xf32> to vector<8x128xf32>
    %cst_51 = arith.constant 5.000000e-01 : f32
    %110 = vector.broadcast %cst_51 : f32 to vector<8x128xf32>
    %111 = arith.mulf %110, %109 : vector<8x128xf32>
    %112 = math.tanh %111 : vector<8x128xf32>
    %cst_52 = arith.constant 5.000000e-01 : f32
    %113 = vector.broadcast %cst_52 : f32 to vector<8x128xf32>
    %114 = arith.mulf %113, %112 : vector<8x128xf32>
    %cst_53 = arith.constant 5.000000e-01 : f32
    %115 = vector.broadcast %cst_53 : f32 to vector<8x128xf32>
    %116 = arith.addf %114, %115 : vector<8x128xf32>
    %117 = arith.mulf %106, %82 : vector<8x128xf32>
    %118 = arith.mulf %98, %108 : vector<8x128xf32>
    %119 = arith.addf %117, %118 : vector<8x128xf32>
    %120 = math.tanh %119 : vector<8x128xf32>
    %121 = arith.mulf %116, %120 : vector<8x128xf32>
    %c2 = arith.constant 2 : index
    %c0_54 = arith.constant 0 : index
    %c0_55 = arith.constant 0 : index
    %122 = vector.load %arg8[%c2, %c0_54, %c0_55] : memref<8x8x128xf32, #tpu.memory_space<vmem>>, vector<1x8x128xf32>
    %123 = vector.shape_cast %122 : vector<1x8x128xf32> to vector<8x128xf32>
    %124 = vector.shape_cast %121 : vector<8x128xf32> to vector<1x8x128xf32>
    tpu.vector_store %arg8[%c2, %c0_54, %c0_55], %124 {strides = array<i32>} : memref<8x8x128xf32, #tpu.memory_space<vmem>>, vector<1x8x128xf32>,
    %c24 = arith.constant 24 : index
    %c0_56 = arith.constant 0 : index
    %125 = vector.load %arg12[%c24, %c0_56] : memref<64x512xf32, #tpu.memory_space<vmem>>, vector<8x512xf32>
    %cst_57 = arith.constant dense<0.000000e+00> : vector<8x512xf32>
    %126 = tpu.matmul %121, %11, %cst_57 {dimension_numbers = #tpu.dot_dimension_numbers<[1], [0], [0], [1], [0, 0, 1, 1], [], []>} : vector<8x128xf32>, vector<128x512xf32>, vector<8x512xf32> -> vector<8x512xf32>
    %127 = arith.addf %125, %126 : vector<8x512xf32>
    %128 = vector.extract_strided_slice %127 {offsets = [0, 0], sizes = [8, 128], strides = [1, 1]} : vector<8x512xf32> to vector<8x128xf32>
    %cst_58 = arith.constant 5.000000e-01 : f32
    %129 = vector.broadcast %cst_58 : f32 to vector<8x128xf32>
    %130 = arith.mulf %129, %128 : vector<8x128xf32>
    %131 = math.tanh %130 : vector<8x128xf32>
    %cst_59 = arith.constant 5.000000e-01 : f32
    %132 = vector.broadcast %cst_59 : f32 to vector<8x128xf32>
    %133 = arith.mulf %132, %131 : vector<8x128xf32>
    %cst_60 = arith.constant 5.000000e-01 : f32
    %134 = vector.broadcast %cst_60 : f32 to vector<8x128xf32>
    %135 = arith.addf %133, %134 : vector<8x128xf32>
    %136 = vector.extract_strided_slice %127 {offsets = [0, 128], sizes = [8, 128], strides = [1, 1]} : vector<8x512xf32> to vector<8x128xf32>
    %cst_61 = arith.constant 5.000000e-01 : f32
    %137 = vector.broadcast %cst_61 : f32 to vector<8x128xf32>
    %138 = arith.mulf %137, %136 : vector<8x128xf32>
    %139 = math.tanh %138 : vector<8x128xf32>
    %cst_62 = arith.constant 5.000000e-01 : f32
    %140 = vector.broadcast %cst_62 : f32 to vector<8x128xf32>
    %141 = arith.mulf %140, %139 : vector<8x128xf32>
    %cst_63 = arith.constant 5.000000e-01 : f32
    %142 = vector.broadcast %cst_63 : f32 to vector<8x128xf32>
    %143 = arith.addf %141, %142 : vector<8x128xf32>
    %144 = vector.extract_strided_slice %127 {offsets = [0, 256], sizes = [8, 128], strides = [1, 1]} : vector<8x512xf32> to vector<8x128xf32>
    %145 = math.tanh %144 : vector<8x128xf32>
    %146 = vector.extract_strided_slice %127 {offsets = [0, 384], sizes = [8, 128], strides = [1, 1]} : vector<8x512xf32> to vector<8x128xf32>
    %cst_64 = arith.constant 5.000000e-01 : f32
    %147 = vector.broadcast %cst_64 : f32 to vector<8x128xf32>
    %148 = arith.mulf %147, %146 : vector<8x128xf32>
    %149 = math.tanh %148 : vector<8x128xf32>
    %cst_65 = arith.constant 5.000000e-01 : f32
    %150 = vector.broadcast %cst_65 : f32 to vector<8x128xf32>
    %151 = arith.mulf %150, %149 : vector<8x128xf32>
    %cst_66 = arith.constant 5.000000e-01 : f32
    %152 = vector.broadcast %cst_66 : f32 to vector<8x128xf32>
    %153 = arith.addf %151, %152 : vector<8x128xf32>
    %154 = arith.mulf %143, %119 : vector<8x128xf32>
    %155 = arith.mulf %135, %145 : vector<8x128xf32>
    %156 = arith.addf %154, %155 : vector<8x128xf32>
    %157 = math.tanh %156 : vector<8x128xf32>
    %158 = arith.mulf %153, %157 : vector<8x128xf32>
    %c3 = arith.constant 3 : index
    %c0_67 = arith.constant 0 : index
    %c0_68 = arith.constant 0 : index
    %159 = vector.load %arg8[%c3, %c0_67, %c0_68] : memref<8x8x128xf32, #tpu.memory_space<vmem>>, vector<1x8x128xf32>
    %160 = vector.shape_cast %159 : vector<1x8x128xf32> to vector<8x128xf32>
    %161 = vector.shape_cast %158 : vector<8x128xf32> to vector<1x8x128xf32>
    tpu.vector_store %arg8[%c3, %c0_67, %c0_68], %161 {strides = array<i32>} : memref<8x8x128xf32, #tpu.memory_space<vmem>>, vector<1x8x128xf32>,
    %c32 = arith.constant 32 : index
    %c0_69 = arith.constant 0 : index
    %162 = vector.load %arg12[%c32, %c0_69] : memref<64x512xf32, #tpu.memory_space<vmem>>, vector<8x512xf32>
    %cst_70 = arith.constant dense<0.000000e+00> : vector<8x512xf32>
    %163 = tpu.matmul %158, %11, %cst_70 {dimension_numbers = #tpu.dot_dimension_numbers<[1], [0], [0], [1], [0, 0, 1, 1], [], []>} : vector<8x128xf32>, vector<128x512xf32>, vector<8x512xf32> -> vector<8x512xf32>
    %164 = arith.addf %162, %163 : vector<8x512xf32>
    %165 = vector.extract_strided_slice %164 {offsets = [0, 0], sizes = [8, 128], strides = [1, 1]} : vector<8x512xf32> to vector<8x128xf32>
    %cst_71 = arith.constant 5.000000e-01 : f32
    %166 = vector.broadcast %cst_71 : f32 to vector<8x128xf32>
    %167 = arith.mulf %166, %165 : vector<8x128xf32>
    %168 = math.tanh %167 : vector<8x128xf32>
    %cst_72 = arith.constant 5.000000e-01 : f32
    %169 = vector.broadcast %cst_72 : f32 to vector<8x128xf32>
    %170 = arith.mulf %169, %168 : vector<8x128xf32>
    %cst_73 = arith.constant 5.000000e-01 : f32
    %171 = vector.broadcast %cst_73 : f32 to vector<8x128xf32>
    %172 = arith.addf %170, %171 : vector<8x128xf32>
    %173 = vector.extract_strided_slice %164 {offsets = [0, 128], sizes = [8, 128], strides = [1, 1]} : vector<8x512xf32> to vector<8x128xf32>
    %cst_74 = arith.constant 5.000000e-01 : f32
    %174 = vector.broadcast %cst_74 : f32 to vector<8x128xf32>
    %175 = arith.mulf %174, %173 : vector<8x128xf32>
    %176 = math.tanh %175 : vector<8x128xf32>
    %cst_75 = arith.constant 5.000000e-01 : f32
    %177 = vector.broadcast %cst_75 : f32 to vector<8x128xf32>
    %178 = arith.mulf %177, %176 : vector<8x128xf32>
    %cst_76 = arith.constant 5.000000e-01 : f32
    %179 = vector.broadcast %cst_76 : f32 to vector<8x128xf32>
    %180 = arith.addf %178, %179 : vector<8x128xf32>
    %181 = vector.extract_strided_slice %164 {offsets = [0, 256], sizes = [8, 128], strides = [1, 1]} : vector<8x512xf32> to vector<8x128xf32>
    %182 = math.tanh %181 : vector<8x128xf32>
    %183 = vector.extract_strided_slice %164 {offsets = [0, 384], sizes = [8, 128], strides = [1, 1]} : vector<8x512xf32> to vector<8x128xf32>
    %cst_77 = arith.constant 5.000000e-01 : f32
    %184 = vector.broadcast %cst_77 : f32 to vector<8x128xf32>
    %185 = arith.mulf %184, %183 : vector<8x128xf32>
    %186 = math.tanh %185 : vector<8x128xf32>
    %cst_78 = arith.constant 5.000000e-01 : f32
    %187 = vector.broadcast %cst_78 : f32 to vector<8x128xf32>
    %188 = arith.mulf %187, %186 : vector<8x128xf32>
    %cst_79 = arith.constant 5.000000e-01 : f32
    %189 = vector.broadcast %cst_79 : f32 to vector<8x128xf32>
    %190 = arith.addf %188, %189 : vector<8x128xf32>
    %191 = arith.mulf %180, %156 : vector<8x128xf32>
    %192 = arith.mulf %172, %182 : vector<8x128xf32>
    %193 = arith.addf %191, %192 : vector<8x128xf32>
    %194 = math.tanh %193 : vector<8x128xf32>
    %195 = arith.mulf %190, %194 : vector<8x128xf32>
    %c4 = arith.constant 4 : index
    %c0_80 = arith.constant 0 : index
    %c0_81 = arith.constant 0 : index
    %196 = vector.load %arg8[%c4, %c0_80, %c0_81] : memref<8x8x128xf32, #tpu.memory_space<vmem>>, vector<1x8x128xf32>
    %197 = vector.shape_cast %196 : vector<1x8x128xf32> to vector<8x128xf32>
    %198 = vector.shape_cast %195 : vector<8x128xf32> to vector<1x8x128xf32>
    tpu.vector_store %arg8[%c4, %c0_80, %c0_81], %198 {strides = array<i32>} : memref<8x8x128xf32, #tpu.memory_space<vmem>>, vector<1x8x128xf32>,
    %c40 = arith.constant 40 : index
    %c0_82 = arith.constant 0 : index
    %199 = vector.load %arg12[%c40, %c0_82] : memref<64x512xf32, #tpu.memory_space<vmem>>, vector<8x512xf32>
    %cst_83 = arith.constant dense<0.000000e+00> : vector<8x512xf32>
    %200 = tpu.matmul %195, %11, %cst_83 {dimension_numbers = #tpu.dot_dimension_numbers<[1], [0], [0], [1], [0, 0, 1, 1], [], []>} : vector<8x128xf32>, vector<128x512xf32>, vector<8x512xf32> -> vector<8x512xf32>
    %201 = arith.addf %199, %200 : vector<8x512xf32>
    %202 = vector.extract_strided_slice %201 {offsets = [0, 0], sizes = [8, 128], strides = [1, 1]} : vector<8x512xf32> to vector<8x128xf32>
    %cst_84 = arith.constant 5.000000e-01 : f32
    %203 = vector.broadcast %cst_84 : f32 to vector<8x128xf32>
    %204 = arith.mulf %203, %202 : vector<8x128xf32>
    %205 = math.tanh %204 : vector<8x128xf32>
    %cst_85 = arith.constant 5.000000e-01 : f32
    %206 = vector.broadcast %cst_85 : f32 to vector<8x128xf32>
    %207 = arith.mulf %206, %205 : vector<8x128xf32>
    %cst_86 = arith.constant 5.000000e-01 : f32
    %208 = vector.broadcast %cst_86 : f32 to vector<8x128xf32>
    %209 = arith.addf %207, %208 : vector<8x128xf32>
    %210 = vector.extract_strided_slice %201 {offsets = [0, 128], sizes = [8, 128], strides = [1, 1]} : vector<8x512xf32> to vector<8x128xf32>
    %cst_87 = arith.constant 5.000000e-01 : f32
    %211 = vector.broadcast %cst_87 : f32 to vector<8x128xf32>
    %212 = arith.mulf %211, %210 : vector<8x128xf32>
    %213 = math.tanh %212 : vector<8x128xf32>
    %cst_88 = arith.constant 5.000000e-01 : f32
    %214 = vector.broadcast %cst_88 : f32 to vector<8x128xf32>
    %215 = arith.mulf %214, %213 : vector<8x128xf32>
    %cst_89 = arith.constant 5.000000e-01 : f32
    %216 = vector.broadcast %cst_89 : f32 to vector<8x128xf32>
    %217 = arith.addf %215, %216 : vector<8x128xf32>
    %218 = vector.extract_strided_slice %201 {offsets = [0, 256], sizes = [8, 128], strides = [1, 1]} : vector<8x512xf32> to vector<8x128xf32>
    %219 = math.tanh %218 : vector<8x128xf32>
    %220 = vector.extract_strided_slice %201 {offsets = [0, 384], sizes = [8, 128], strides = [1, 1]} : vector<8x512xf32> to vector<8x128xf32>
    %cst_90 = arith.constant 5.000000e-01 : f32
    %221 = vector.broadcast %cst_90 : f32 to vector<8x128xf32>
    %222 = arith.mulf %221, %220 : vector<8x128xf32>
    %223 = math.tanh %222 : vector<8x128xf32>
    %cst_91 = arith.constant 5.000000e-01 : f32
    %224 = vector.broadcast %cst_91 : f32 to vector<8x128xf32>
    %225 = arith.mulf %224, %223 : vector<8x128xf32>
    %cst_92 = arith.constant 5.000000e-01 : f32
    %226 = vector.broadcast %cst_92 : f32 to vector<8x128xf32>
    %227 = arith.addf %225, %226 : vector<8x128xf32>
    %228 = arith.mulf %217, %193 : vector<8x128xf32>
    %229 = arith.mulf %209, %219 : vector<8x128xf32>
    %230 = arith.addf %228, %229 : vector<8x128xf32>
    %231 = math.tanh %230 : vector<8x128xf32>
    %232 = arith.mulf %227, %231 : vector<8x128xf32>
    %c5 = arith.constant 5 : index
    %c0_93 = arith.constant 0 : index
    %c0_94 = arith.constant 0 : index
    %233 = vector.load %arg8[%c5, %c0_93, %c0_94] : memref<8x8x128xf32, #tpu.memory_space<vmem>>, vector<1x8x128xf32>
    %234 = vector.shape_cast %233 : vector<1x8x128xf32> to vector<8x128xf32>
    %235 = vector.shape_cast %232 : vector<8x128xf32> to vector<1x8x128xf32>
    tpu.vector_store %arg8[%c5, %c0_93, %c0_94], %235 {strides = array<i32>} : memref<8x8x128xf32, #tpu.memory_space<vmem>>, vector<1x8x128xf32>,
    %c48 = arith.constant 48 : index
    %c0_95 = arith.constant 0 : index
    %236 = vector.load %arg12[%c48, %c0_95] : memref<64x512xf32, #tpu.memory_space<vmem>>, vector<8x512xf32>
    %cst_96 = arith.constant dense<0.000000e+00> : vector<8x512xf32>
    %237 = tpu.matmul %232, %11, %cst_96 {dimension_numbers = #tpu.dot_dimension_numbers<[1], [0], [0], [1], [0, 0, 1, 1], [], []>} : vector<8x128xf32>, vector<128x512xf32>, vector<8x512xf32> -> vector<8x512xf32>
    %238 = arith.addf %236, %237 : vector<8x512xf32>
    %239 = vector.extract_strided_slice %238 {offsets = [0, 0], sizes = [8, 128], strides = [1, 1]} : vector<8x512xf32> to vector<8x128xf32>
    %cst_97 = arith.constant 5.000000e-01 : f32
    %240 = vector.broadcast %cst_97 : f32 to vector<8x128xf32>
    %241 = arith.mulf %240, %239 : vector<8x128xf32>
    %242 = math.tanh %241 : vector<8x128xf32>
    %cst_98 = arith.constant 5.000000e-01 : f32
    %243 = vector.broadcast %cst_98 : f32 to vector<8x128xf32>
    %244 = arith.mulf %243, %242 : vector<8x128xf32>
    %cst_99 = arith.constant 5.000000e-01 : f32
    %245 = vector.broadcast %cst_99 : f32 to vector<8x128xf32>
    %246 = arith.addf %244, %245 : vector<8x128xf32>
    %247 = vector.extract_strided_slice %238 {offsets = [0, 128], sizes = [8, 128], strides = [1, 1]} : vector<8x512xf32> to vector<8x128xf32>
    %cst_100 = arith.constant 5.000000e-01 : f32
    %248 = vector.broadcast %cst_100 : f32 to vector<8x128xf32>
    %249 = arith.mulf %248, %247 : vector<8x128xf32>
    %250 = math.tanh %249 : vector<8x128xf32>
    %cst_101 = arith.constant 5.000000e-01 : f32
    %251 = vector.broadcast %cst_101 : f32 to vector<8x128xf32>
    %252 = arith.mulf %251, %250 : vector<8x128xf32>
    %cst_102 = arith.constant 5.000000e-01 : f32
    %253 = vector.broadcast %cst_102 : f32 to vector<8x128xf32>
    %254 = arith.addf %252, %253 : vector<8x128xf32>
    %255 = vector.extract_strided_slice %238 {offsets = [0, 256], sizes = [8, 128], strides = [1, 1]} : vector<8x512xf32> to vector<8x128xf32>
    %256 = math.tanh %255 : vector<8x128xf32>
    %257 = vector.extract_strided_slice %238 {offsets = [0, 384], sizes = [8, 128], strides = [1, 1]} : vector<8x512xf32> to vector<8x128xf32>
    %cst_103 = arith.constant 5.000000e-01 : f32
    %258 = vector.broadcast %cst_103 : f32 to vector<8x128xf32>
    %259 = arith.mulf %258, %257 : vector<8x128xf32>
    %260 = math.tanh %259 : vector<8x128xf32>
    %cst_104 = arith.constant 5.000000e-01 : f32
    %261 = vector.broadcast %cst_104 : f32 to vector<8x128xf32>
    %262 = arith.mulf %261, %260 : vector<8x128xf32>
    %cst_105 = arith.constant 5.000000e-01 : f32
    %263 = vector.broadcast %cst_105 : f32 to vector<8x128xf32>
    %264 = arith.addf %262, %263 : vector<8x128xf32>
    %265 = arith.mulf %254, %230 : vector<8x128xf32>
    %266 = arith.mulf %246, %256 : vector<8x128xf32>
    %267 = arith.addf %265, %266 : vector<8x128xf32>
    %268 = math.tanh %267 : vector<8x128xf32>
    %269 = arith.mulf %264, %268 : vector<8x128xf32>
    %c6 = arith.constant 6 : index
    %c0_106 = arith.constant 0 : index
    %c0_107 = arith.constant 0 : index
    %270 = vector.load %arg8[%c6, %c0_106, %c0_107] : memref<8x8x128xf32, #tpu.memory_space<vmem>>, vector<1x8x128xf32>
    %271 = vector.shape_cast %270 : vector<1x8x128xf32> to vector<8x128xf32>
    %272 = vector.shape_cast %269 : vector<8x128xf32> to vector<1x8x128xf32>
    tpu.vector_store %arg8[%c6, %c0_106, %c0_107], %272 {strides = array<i32>} : memref<8x8x128xf32, #tpu.memory_space<vmem>>, vector<1x8x128xf32>,
    %c56 = arith.constant 56 : index
    %c0_108 = arith.constant 0 : index
    %273 = vector.load %arg12[%c56, %c0_108] : memref<64x512xf32, #tpu.memory_space<vmem>>, vector<8x512xf32>
    %cst_109 = arith.constant dense<0.000000e+00> : vector<8x512xf32>
    %274 = tpu.matmul %269, %11, %cst_109 {dimension_numbers = #tpu.dot_dimension_numbers<[1], [0], [0], [1], [0, 0, 1, 1], [], []>} : vector<8x128xf32>, vector<128x512xf32>, vector<8x512xf32> -> vector<8x512xf32>
    %275 = arith.addf %273, %274 : vector<8x512xf32>
    %276 = vector.extract_strided_slice %275 {offsets = [0, 0], sizes = [8, 128], strides = [1, 1]} : vector<8x512xf32> to vector<8x128xf32>
    %cst_110 = arith.constant 5.000000e-01 : f32
    %277 = vector.broadcast %cst_110 : f32 to vector<8x128xf32>
    %278 = arith.mulf %277, %276 : vector<8x128xf32>
    %279 = math.tanh %278 : vector<8x128xf32>
    %cst_111 = arith.constant 5.000000e-01 : f32
    %280 = vector.broadcast %cst_111 : f32 to vector<8x128xf32>
    %281 = arith.mulf %280, %279 : vector<8x128xf32>
    %cst_112 = arith.constant 5.000000e-01 : f32
    %282 = vector.broadcast %cst_112 : f32 to vector<8x128xf32>
    %283 = arith.addf %281, %282 : vector<8x128xf32>
    %284 = vector.extract_strided_slice %275 {offsets = [0, 128], sizes = [8, 128], strides = [1, 1]} : vector<8x512xf32> to vector<8x128xf32>
    %cst_113 = arith.constant 5.000000e-01 : f32
    %285 = vector.broadcast %cst_113 : f32 to vector<8x128xf32>
    %286 = arith.mulf %285, %284 : vector<8x128xf32>
    %287 = math.tanh %286 : vector<8x128xf32>
    %cst_114 = arith.constant 5.000000e-01 : f32
    %288 = vector.broadcast %cst_114 : f32 to vector<8x128xf32>
    %289 = arith.mulf %288, %287 : vector<8x128xf32>
    %cst_115 = arith.constant 5.000000e-01 : f32
    %290 = vector.broadcast %cst_115 : f32 to vector<8x128xf32>
    %291 = arith.addf %289, %290 : vector<8x128xf32>
    %292 = vector.extract_strided_slice %275 {offsets = [0, 256], sizes = [8, 128], strides = [1, 1]} : vector<8x512xf32> to vector<8x128xf32>
    %293 = math.tanh %292 : vector<8x128xf32>
    %294 = vector.extract_strided_slice %275 {offsets = [0, 384], sizes = [8, 128], strides = [1, 1]} : vector<8x512xf32> to vector<8x128xf32>
    %cst_116 = arith.constant 5.000000e-01 : f32
    %295 = vector.broadcast %cst_116 : f32 to vector<8x128xf32>
    %296 = arith.mulf %295, %294 : vector<8x128xf32>
    %297 = math.tanh %296 : vector<8x128xf32>
    %cst_117 = arith.constant 5.000000e-01 : f32
    %298 = vector.broadcast %cst_117 : f32 to vector<8x128xf32>
    %299 = arith.mulf %298, %297 : vector<8x128xf32>
    %cst_118 = arith.constant 5.000000e-01 : f32
    %300 = vector.broadcast %cst_118 : f32 to vector<8x128xf32>
    %301 = arith.addf %299, %300 : vector<8x128xf32>
    %302 = arith.mulf %291, %267 : vector<8x128xf32>
    %303 = arith.mulf %283, %293 : vector<8x128xf32>
    %304 = arith.addf %302, %303 : vector<8x128xf32>
    %305 = math.tanh %304 : vector<8x128xf32>
    %306 = arith.mulf %301, %305 : vector<8x128xf32>
    %c7 = arith.constant 7 : index
    %c0_119 = arith.constant 0 : index
    %c0_120 = arith.constant 0 : index
    %307 = vector.load %arg8[%c7, %c0_119, %c0_120] : memref<8x8x128xf32, #tpu.memory_space<vmem>>, vector<1x8x128xf32>
    %308 = vector.shape_cast %307 : vector<1x8x128xf32> to vector<8x128xf32>
    %309 = vector.shape_cast %306 : vector<8x128xf32> to vector<1x8x128xf32>
    tpu.vector_store %arg8[%c7, %c0_119, %c0_120], %309 {strides = array<i32>} : memref<8x8x128xf32, #tpu.memory_space<vmem>>, vector<1x8x128xf32>,
    %c0_121 = arith.constant 0 : index
    %c0_122 = arith.constant 0 : index
    %310 = vector.load %arg10[%c0_121, %c0_122] : memref<8x128xf32, #tpu.memory_space<vmem>>, vector<8x128xf32>
    tpu.vector_store %arg10[%c0_121, %c0_122], %306 {strides = array<i32>} : memref<8x128xf32, #tpu.memory_space<vmem>>, vector<8x128xf32>,
    %c0_123 = arith.constant 0 : index
    %c0_124 = arith.constant 0 : index
    %311 = vector.load %arg11[%c0_123, %c0_124] : memref<8x128xf32, #tpu.memory_space<vmem>>, vector<8x128xf32>
    tpu.vector_store %arg11[%c0_123, %c0_124], %304 {strides = array<i32>} : memref<8x128xf32, #tpu.memory_space<vmem>>, vector<8x128xf32>,
    %c0_i32_125 = arith.constant 0 : i32
    %312 = arith.cmpi eq, %arg1, %c0_i32_125 : i32
    %313 = arith.extui %312 : i1 to i32
    %c0_i32_126 = arith.constant 0 : i32
    %314 = arith.cmpi ne, %313, %c0_i32_126 : i32
    scf.if %314 {
      %c0_127 = arith.constant 0 : index
      %c0_128 = arith.constant 0 : index
      %315 = vector.load %arg9[%c0_127, %c0_128] : memref<8x128xf32, #tpu.memory_space<vmem>>, vector<8x128xf32>
      tpu.vector_store %arg9[%c0_127, %c0_128], %304 {strides = array<i32>} : memref<8x128xf32, #tpu.memory_space<vmem>>, vector<8x128xf32>,
    } else {
    }
    return
  }
  func.func @transform_0(%arg0: i32, %arg1: i32) -> (i32, i32, i32) {
    %c0_i32 = arith.constant 0 : i32
    %c0_i32_0 = arith.constant 0 : i32
    return %arg1, %arg0, %c0_i32 : i32, i32, i32
  }
  func.func @transform_1(%arg0: i32, %arg1: i32) -> (i32, i32) {
    %c0_i32 = arith.constant 0 : i32
    %c0_i32_0 = arith.constant 0 : i32
    %c0_i32_1 = arith.constant 0 : i32
    return %c0_i32, %c0_i32_0 : i32, i32
  }
  func.func @transform_2(%arg0: i32, %arg1: i32) -> (i32, i32) {
    %c0_i32 = arith.constant 0 : i32
    %c0_i32_0 = arith.constant 0 : i32
    %c0_i32_1 = arith.constant 0 : i32
    return %c0_i32, %c0_i32_0 : i32, i32
  }
  func.func @transform_3(%arg0: i32, %arg1: i32) -> (i32, i32) {
    %c0_i32 = arith.constant 0 : i32
    %c0_i32_0 = arith.constant 0 : i32
    %c0_i32_1 = arith.constant 0 : i32
    return %c0_i32, %c0_i32_0 : i32, i32
  }
  func.func @transform_4(%arg0: i32, %arg1: i32) -> (i32, i32) {
    %c0_i32 = arith.constant 0 : i32
    %c0_i32_0 = arith.constant 0 : i32
    return %arg0, %c0_i32 : i32, i32
  }
  func.func @transform_5(%arg0: i32, %arg1: i32) -> (i32, i32) {
    %c0_i32 = arith.constant 0 : i32
    %c0_i32_0 = arith.constant 0 : i32
    return %arg0, %c0_i32 : i32, i32
  }
  func.func @transform_6(%arg0: i32, %arg1: i32) -> (i32, i32, i32) {
    %c0_i32 = arith.constant 0 : i32
    %c0_i32_0 = arith.constant 0 : i32
    return %arg1, %arg0, %c0_i32 : i32, i32, i32
  }
  func.func @transform_7(%arg0: i32, %arg1: i32) -> (i32, i32) {
    %c0_i32 = arith.constant 0 : i32
    %c0_i32_0 = arith.constant 0 : i32
    return %arg0, %c0_i32 : i32, i32
  }
}

</mosaic_0001>

<llo_original>
// kernel: tpu_custom_call.1
$region0: #{tpu_custom_call.1}
  #allocation0 [shape = 'u32[]', space=smem, size = 0x4, offset = 0x4, fixed_abs, tag = 'smem constant byte address 0x4 - core index']
  #allocation1 [shape = 'u32[144,128]{1,0:T(1,128)}', space=vmem, size = 0x12000, scoped, tag = 'internal scratch']
  #allocation2 [shape = 'f32[8,128]{1,0:T(8,128)}', space=vmem, size = 0x1000, scoped, tag = 'scratch operand']
  #allocation3 [shape = 'f32[8,128]{1,0:T(8,128)}', space=vmem, size = 0x1000, scoped, tag = 'scratch operand']
  #allocation4 [shape = 'f32[64,512]{1,0:T(8,128)}', space=vmem, size = 0x20000, scoped, tag = 'scratch operand']
  %s0 = inlined_call_operand.hbm [shape: f32[8,8,128], index: 0, kind: input, shape index: {}]
  %s1 = inlined_call_operand.hbm [shape: f32[128,512], index: 1, kind: input, shape index: {}]
  %s2 = inlined_call_operand.hbm [shape: f32[128,512], index: 2, kind: input, shape index: {}]
  %s3 = inlined_call_operand.hbm [shape: f32[1,512], index: 3, kind: input, shape index: {}]
  %s4 = inlined_call_operand.vmem [shape: f32[8,128], index: 4, kind: input, shape index: {}]
  %s5 = inlined_call_operand.vmem [shape: f32[8,128], index: 5, kind: input, shape index: {}]
  %s6 = inlined_call_operand.hbm [shape: f32[8,8,128], index: 6, kind: output, shape index: {0}]
  %s7 = inlined_call_operand.hbm [shape: f32[8,128], index: 7, kind: output, shape index: {1}]
  %8 = xla_tuple %s6, %s7
  %s9 = sld [smem:[#allocation0]]
  $region66: #{tpu_custom_call.1} parent=0
    _
  %s11 = ssub.s32 1, %s9
  %s12 = scalar_select 0, %s11, %s9
  $region1: #{tpu_custom_call.1} parent=0
    #allocation5 [shape = 'u8[32768]{0}', space=vmem, size = 0x8000, scoped, tag = 'input window, operand 0, single buffered']
    #allocation6 [shape = 's32[1]{0}', space=sflag, size = 0x4, scoped, tag = 'scoped memory for tpu_custom_call.1']
    #allocation7 [shape = 's32[1]{0}', space=sflag, size = 0x4, scoped, tag = 'scoped memory for tpu_custom_call.1']
    #allocation8 [shape = 'u8[262144]{0}', space=vmem, size = 0x40000, scoped, tag = 'input window, operand 1, single buffered']
    #allocation9 [shape = 's32[1]{0}', space=sflag, size = 0x4, scoped, tag = 'scoped memory for tpu_custom_call.1']
    #allocation10 [shape = 'u8[262144]{0}', space=vmem, size = 0x40000, scoped, tag = 'input window, operand 2, single buffered']
    #allocation11 [shape = 'u8[2048]{0}', space=vmem, size = 0x800, scoped, tag = 'input window, operand 3, single buffered']
    #allocation12 [shape = 's32[1]{0}', space=sflag, size = 0x4, scoped, tag = 'scoped memory for tpu_custom_call.1']
    #allocation13 [shape = 'u8[32768]{0}', space=vmem, size = 0x8000, scoped, tag = 'output window, operand 0, single buffered']
    #allocation14 [shape = 'u8[4096]{0}', space=vmem, size = 0x1000, scoped, tag = 'output window, operand 1, single buffered']
    #allocation15 [shape = 's32[1]{0}', space=sflag, size = 0x4, scoped, tag = 'scoped memory for tpu_custom_call.1']
    %13 = vsyncpa [#allocation6], 0
    %14 = vsyncpa [#allocation9], 0
    %15 = vsyncpa [#allocation12], 0
    %16 = vsyncpa [#allocation7], 0
    %17 = vsyncpa [#allocation15], 0
    // Predicated region
    $region2: #{tpu_custom_call.1} parent=1 // pred_check
      _
    $region3: #{tpu_custom_call.1} parent=1 // pred_check_branch
      %19 = sbr.rel (0) target = $region5
    $region4: #{tpu_custom_call.1} parent=1 // pred_region
      %s21 = ssub.s32 1024, 1024
      %22 = vsyncadd [#allocation6], %s21
      %s23 = sshll.u32 [#allocation5], 4
      %s24 = int_to_ptr.vmem [resolvable:$true] %s23
      %29 = dma.hbm_to_vmem [thread:$0]  %s0, 1024, %s24, [#allocation6], 128, 128, 8
    $region5: #{tpu_custom_call.1} parent=1 // pred_fallthru
      _
    // Predicated region
    $region6: #{tpu_custom_call.1} parent=1 // pred_check
      _
    $region7: #{tpu_custom_call.1} parent=1 // pred_check_branch
      %31 = sbr.rel (0) target = $region9
    $region8: #{tpu_custom_call.1} parent=1 // pred_region
      %s33 = ssub.s32 8192, 8192
      %34 = vsyncadd [#allocation9], %s33
      %s35 = sshll.u32 [#allocation8], 4
      %s36 = int_to_ptr.vmem [resolvable:$true] %s35
      %41 = dma.hbm_to_vmem [thread:$0]  %s1, 8192, %s36, [#allocation9], 512, 512, 32
    $region9: #{tpu_custom_call.1} parent=1 // pred_fallthru
      _
    // Predicated region
    $region10: #{tpu_custom_call.1} parent=1 // pred_check
      _
    $region11: #{tpu_custom_call.1} parent=1 // pred_check_branch
      %43 = sbr.rel (0) target = $region13
    $region12: #{tpu_custom_call.1} parent=1 // pred_region
      %s45 = ssub.s32 8192, 8192
      %46 = vsyncadd [#allocation9], %s45
      %s47 = sshll.u32 [#allocation10], 4
      %s48 = int_to_ptr.vmem [resolvable:$true] %s47
      %53 = dma.hbm_to_vmem [thread:$0]  %s2, 8192, %s48, [#allocation9], 512, 512, 32
    $region13: #{tpu_custom_call.1} parent=1 // pred_fallthru
      _
    // Predicated region
    $region14: #{tpu_custom_call.1} parent=1 // pred_check
      _
    $region15: #{tpu_custom_call.1} parent=1 // pred_check_branch
      %55 = sbr.rel (0) target = $region17
    $region16: #{tpu_custom_call.1} parent=1 // pred_region
      %s57 = ssub.s32 64, 64
      %58 = vsyncadd [#allocation12], %s57
      %s60 = sshll.u32 [#allocation11], 4
      %s61 = int_to_ptr.vmem [resolvable:$true] %s60
      %63 = dma.hbm_to_vmem [thread:$0]  %s3, 64, %s61, [#allocation12]
    $region17: #{tpu_custom_call.1} parent=1 // pred_fallthru
      _
    // Predicated region
    $region18: #{tpu_custom_call.1} parent=1 // pred_check
      _
    $region19: #{tpu_custom_call.1} parent=1 // pred_check_branch
      %65 = sbr.rel (0) target = $region21
    $region20: #{tpu_custom_call.1} parent=1 // pred_region
      _
    $region21: #{tpu_custom_call.1} parent=1 // pred_fallthru
      _
    // Predicated region
    $region22: #{tpu_custom_call.1} parent=1 // pred_check
      _
    $region23: #{tpu_custom_call.1} parent=1 // pred_check_branch
      %67 = sbr.rel (0) target = $region25
    $region24: #{tpu_custom_call.1} parent=1 // pred_region
      _
    $region25: #{tpu_custom_call.1} parent=1 // pred_fallthru
      _
    // Predicated region
    $region26: #{tpu_custom_call.1} parent=1 // pred_check
      _
    $region27: #{tpu_custom_call.1} parent=1 // pred_check_branch
      %69 = sbr.rel (0) target = $region29
    $region28: #{tpu_custom_call.1} parent=1 // pred_region
      %70 = dma.done [#allocation6], 1024
    $region29: #{tpu_custom_call.1} parent=1 // pred_fallthru
      _
    // Predicated region
    $region30: #{tpu_custom_call.1} parent=1 // pred_check
      _
    $region31: #{tpu_custom_call.1} parent=1 // pred_check_branch
      %72 = sbr.rel (0) target = $region33
    $region32: #{tpu_custom_call.1} parent=1 // pred_region
      %73 = dma.done [#allocation9], 8192
    $region33: #{tpu_custom_call.1} parent=1 // pred_fallthru
      _
    // Predicated region
    $region34: #{tpu_custom_call.1} parent=1 // pred_check
      _
    $region35: #{tpu_custom_call.1} parent=1 // pred_check_branch
      %75 = sbr.rel (0) target = $region37
    $region36: #{tpu_custom_call.1} parent=1 // pred_region
      %76 = dma.done [#allocation9], 8192
    $region37: #{tpu_custom_call.1} parent=1 // pred_fallthru
      _
    // Predicated region
    $region38: #{tpu_custom_call.1} parent=1 // pred_check
      _
    $region39: #{tpu_custom_call.1} parent=1 // pred_check_branch
      %78 = sbr.rel (0) target = $region41
    $region40: #{tpu_custom_call.1} parent=1 // pred_region
      %79 = dma.done [#allocation12], 64
    $region41: #{tpu_custom_call.1} parent=1 // pred_fallthru
      _
    %p80 = scmp.eq.s32.totalorder 0, 0
    // Predicated region
    $region42: #{tpu_custom_call.1} parent=1 // pred_check
      %p81 = pneg %p80
    $region43: #{tpu_custom_call.1} parent=1 // pred_check_branch
      %83 = sbr.rel (%p81) target = $region45
    $region44: #{tpu_custom_call.1} parent=1 // pred_region
      %v84 = vld [vmem:[%s4] sm:$0xff]
      %85 = vst [vmem:[#allocation2] sm:$0xff] %v84
      %v86 = vld [vmem:[%s5] sm:$0xff]
      %87 = vst [vmem:[#allocation3] sm:$0xff] %v86
    $region45: #{tpu_custom_call.1} parent=1 // pred_fallthru
      _
    %v88 = vld [vmem:[#allocation5] sm:$0xff]
    %v89 = vld [vmem:[#allocation5 + $0x8] sm:$0xff]
    %v90 = vld [vmem:[#allocation5 + $0x10] sm:$0xff]
    %v91 = vld [vmem:[#allocation5 + $0x18] sm:$0xff]
    %v92 = vld [vmem:[#allocation5 + $0x20] sm:$0xff]
    %v93 = vld [vmem:[#allocation5 + $0x28] sm:$0xff]
    %v94 = vld [vmem:[#allocation5 + $0x30] sm:$0xff]
    %v95 = vld [vmem:[#allocation5 + $0x38] sm:$0xff]
    %v96 = vld [vmem:[#allocation8] sm:$0xff]
    %v97 = vld [vmem:[#allocation8 + $0x8] sm:$0xff]
    %v98 = vld [vmem:[#allocation8 + $0x10] sm:$0xff]
    %v99 = vld [vmem:[#allocation8 + $0x18] sm:$0xff]
    %v100 = vld [vmem:[#allocation8 + $0x20] sm:$0xff]
    %v101 = vld [vmem:[#allocation8 + $0x28] sm:$0xff]
    %v102 = vld [vmem:[#allocation8 + $0x30] sm:$0xff]
    %v103 = vld [vmem:[#allocation8 + $0x38] sm:$0xff]
    %v104 = vld [vmem:[#allocation8 + $0x40] sm:$0xff]
    %v105 = vld [vmem:[#allocation8 + $0x48] sm:$0xff]
    %v106 = vld [vmem:[#allocation8 + $0x50] sm:$0xff]
    %v107 = vld [vmem:[#allocation8 + $0x58] sm:$0xff]
    %v108 = vld [vmem:[#allocation8 + $0x60] sm:$0xff]
    %v109 = vld [vmem:[#allocation8 + $0x68] sm:$0xff]
    %v110 = vld [vmem:[#allocation8 + $0x70] sm:$0xff]
    %v111 = vld [vmem:[#allocation8 + $0x78] sm:$0xff]
    %v112 = vld [vmem:[#allocation8 + $0x80] sm:$0xff]
    %v113 = vld [vmem:[#allocation8 + $0x88] sm:$0xff]
    %v114 = vld [vmem:[#allocation8 + $0x90] sm:$0xff]
    %v115 = vld [vmem:[#allocation8 + $0x98] sm:$0xff]
    %v116 = vld [vmem:[#allocation8 + $0xa0] sm:$0xff]
    %v117 = vld [vmem:[#allocation8 + $0xa8] sm:$0xff]
    %v118 = vld [vmem:[#allocation8 + $0xb0] sm:$0xff]
    %v119 = vld [vmem:[#allocation8 + $0xb8] sm:$0xff]
    %v120 = vld [vmem:[#allocation8 + $0xc0] sm:$0xff]
    %v121 = vld [vmem:[#allocation8 + $0xc8] sm:$0xff]
    %v122 = vld [vmem:[#allocation8 + $0xd0] sm:$0xff]
    %v123 = vld [vmem:[#allocation8 + $0xd8] sm:$0xff]
    %v124 = vld [vmem:[#allocation8 + $0xe0] sm:$0xff]
    %v125 = vld [vmem:[#allocation8 + $0xe8] sm:$0xff]
    %v126 = vld [vmem:[#allocation8 + $0xf0] sm:$0xff]
    %v127 = vld [vmem:[#allocation8 + $0xf8] sm:$0xff]
    %v128 = vld [vmem:[#allocation8 + $0x100] sm:$0xff]
    %v129 = vld [vmem:[#allocation8 + $0x108] sm:$0xff]
    %v130 = vld [vmem:[#allocation8 + $0x110] sm:$0xff]
    %v131 = vld [vmem:[#allocation8 + $0x118] sm:$0xff]
    %v132 = vld [vmem:[#allocation8 + $0x120] sm:$0xff]
    %v133 = vld [vmem:[#allocation8 + $0x128] sm:$0xff]
    %v134 = vld [vmem:[#allocation8 + $0x130] sm:$0xff]
    %v135 = vld [vmem:[#allocation8 + $0x138] sm:$0xff]
    %v136 = vld [vmem:[#allocation8 + $0x140] sm:$0xff]
    %v137 = vld [vmem:[#allocation8 + $0x148] sm:$0xff]
    %v138 = vld [vmem:[#allocation8 + $0x150] sm:$0xff]
    %v139 = vld [vmem:[#allocation8 + $0x158] sm:$0xff]
    %v140 = vld [vmem:[#allocation8 + $0x160] sm:$0xff]
    %v141 = vld [vmem:[#allocation8 + $0x168] sm:$0xff]
    %v142 = vld [vmem:[#allocation8 + $0x170] sm:$0xff]
    %v143 = vld [vmem:[#allocation8 + $0x178] sm:$0xff]
    %v144 = vld [vmem:[#allocation8 + $0x180] sm:$0xff]
    %v145 = vld [vmem:[#allocation8 + $0x188] sm:$0xff]
    %v146 = vld [vmem:[#allocation8 + $0x190] sm:$0xff]
    %v147 = vld [vmem:[#allocation8 + $0x198] sm:$0xff]
    %v148 = vld [vmem:[#allocation8 + $0x1a0] sm:$0xff]
    %v149 = vld [vmem:[#allocation8 + $0x1a8] sm:$0xff]
    %v150 = vld [vmem:[#allocation8 + $0x1b0] sm:$0xff]
    %v151 = vld [vmem:[#allocation8 + $0x1b8] sm:$0xff]
    %v152 = vld [vmem:[#allocation8 + $0x1c0] sm:$0xff]
    %v153 = vld [vmem:[#allocation8 + $0x1c8] sm:$0xff]
    %v154 = vld [vmem:[#allocation8 + $0x1d0] sm:$0xff]
    %v155 = vld [vmem:[#allocation8 + $0x1d8] sm:$0xff]
    %v156 = vld [vmem:[#allocation8 + $0x1e0] sm:$0xff]
    %v157 = vld [vmem:[#allocation8 + $0x1e8] sm:$0xff]
    %v158 = vld [vmem:[#allocation8 + $0x1f0] sm:$0xff]
    %v159 = vld [vmem:[#allocation8 + $0x1f8] sm:$0xff]
    %v160 = vld [vmem:[#allocation11] sm:$0xf]
    %v162 = vlaneseq
    %v163 = vshrl.u32 %v162, 7
    %v164 = vsub.s32 0, %v163
    %v165 = vrot.slane %v160, %v164
    %v166 = vlaneseq
    %v167 = vshrl.u32 %v166, 7
    %v168 = vsub.s32 1, %v167
    %v169 = vrot.slane %v160, %v168
    %v170 = vlaneseq
    %v171 = vshrl.u32 %v170, 7
    %v172 = vsub.s32 2, %v171
    %v173 = vrot.slane %v160, %v172
    %v174 = vlaneseq
    %v175 = vshrl.u32 %v174, 7
    %v176 = vsub.s32 3, %v175
    %v177 = vrot.slane %v160, %v176
    %182 = vmatprep.subr.mxu0 %v97
    %183 = vmatpush1.msra.mxu0 %v96
    %184 = vmatprep.subr.mxu0 %v101
    %185 = vmatpush1.msra.mxu0 %v100
    %186 = vmatprep.subr.mxu0 %v105
    %187 = vmatpush1.msra.mxu0 %v104
    %188 = vmatprep.subr.mxu0 %v109
    %189 = vmatpush1.msra.mxu0 %v108
    %190 = vmatprep.subr.mxu0 %v113
    %191 = vmatpush1.msra.mxu0 %v112
    %192 = vmatprep.subr.mxu0 %v117
    %193 = vmatpush1.msra.mxu0 %v116
    %194 = vmatprep.subr.mxu0 %v121
    %195 = vmatpush1.msra.mxu0 %v120
    %196 = vmatprep.subr.mxu0 %v125
    %197 = vmatpush1.msra.mxu0 %v124
    %198 = vmatprep.subr.mxu0 %v129
    %199 = vmatpush1.msra.mxu0 %v128
    %200 = vmatprep.subr.mxu0 %v133
    %201 = vmatpush1.msra.mxu0 %v132
    %202 = vmatprep.subr.mxu0 %v137
    %203 = vmatpush1.msra.mxu0 %v136
    %204 = vmatprep.subr.mxu0 %v141
    %205 = vmatpush1.msra.mxu0 %v140
    %206 = vmatprep.subr.mxu0 %v145
    %207 = vmatpush1.msra.mxu0 %v144
    %208 = vmatprep.subr.mxu0 %v149
    %209 = vmatpush1.msra.mxu0 %v148
    %210 = vmatprep.subr.mxu0 %v153
    %211 = vmatpush1.msra.mxu0 %v152
    %212 = vmatprep.subr.mxu0 %v157
    %213 = vmatpush1.msra.mxu0 %v156
    %214 = vmatprep.subr.mxu0 0.0
    %215 = vmatpush1.msra.mxu0 0.0
    %216 = vmatprep.subr.mxu0 0.0
    %217 = vmatpush1.msra.mxu0 0.0
    %218 = vmatprep.subr.mxu0 0.0
    %219 = vmatpush1.msra.mxu0 0.0
    %220 = vmatprep.subr.mxu0 0.0
    %221 = vmatpush1.msra.mxu0 0.0
    %222 = vmatprep.subr.mxu0 0.0
    %223 = vmatpush1.msra.mxu0 0.0
    %224 = vmatprep.subr.mxu0 0.0
    %225 = vmatpush1.msra.mxu0 0.0
    %226 = vmatprep.subr.mxu0 0.0
    %227 = vmatpush1.msra.mxu0 0.0
    %228 = vmatprep.subr.mxu0 0.0
    %229 = vmatpush1.msra.mxu0 0.0
    %230 = vmatprep.subr.mxu0 0.0
    %231 = vmatpush1.msra.mxu0 0.0
    %232 = vmatprep.subr.mxu0 0.0
    %233 = vmatpush1.msra.mxu0 0.0
    %234 = vmatprep.subr.mxu0 0.0
    %235 = vmatpush1.msra.mxu0 0.0
    %236 = vmatprep.subr.mxu0 0.0
    %237 = vmatpush1.msra.mxu0 0.0
    %238 = vmatprep.subr.mxu0 0.0
    %239 = vmatpush1.msra.mxu0 0.0
    %240 = vmatprep.subr.mxu0 0.0
    %241 = vmatpush1.msra.mxu0 0.0
    %242 = vmatprep.subr.mxu0 0.0
    %243 = vmatpush1.msra.mxu0 0.0
    %244 = vmatprep.subr.mxu0 0.0
    %245 = vmatpush1.msra.mxu0 0.0
    %246 = vmatprep.mubr.f32.mxu0 0.0
    %247 = vmatmul.mubr.f32.gmra.mrb[0].mxu0 %v88
    %v248 = vpop.f32.mrb[0].mxu0
    %v249 = vadd.f32 %v165, %v248
    %v250 = vpop.f32.mrb[0].mxu0
    %v251 = vadd.f32 %v169, %v250
    %252 = vmatprep.mubr.f32.mxu0 0.0
    %253 = vmatmul.mubr.f32.gmra.mrb[0].mxu0 %v89
    %v254 = vpop.f32.mrb[0].mxu0
    %v255 = vadd.f32 %v165, %v254
    %v256 = vpop.f32.mrb[0].mxu0
    %v257 = vadd.f32 %v169, %v256
    %258 = vmatprep.mubr.f32.mxu0 0.0
    %259 = vmatmul.mubr.f32.gmra.mrb[0].mxu0 %v90
    %v260 = vpop.f32.mrb[0].mxu0
    %v261 = vadd.f32 %v165, %v260
    %v262 = vpop.f32.mrb[0].mxu0
    %v263 = vadd.f32 %v169, %v262
    %264 = vmatprep.mubr.f32.mxu0 0.0
    %265 = vmatmul.mubr.f32.gmra.mrb[0].mxu0 %v91
    %v266 = vpop.f32.mrb[0].mxu0
    %v267 = vadd.f32 %v165, %v266
    %v268 = vpop.f32.mrb[0].mxu0
    %v269 = vadd.f32 %v169, %v268
    %270 = vmatprep.mubr.f32.mxu0 0.0
    %271 = vmatmul.mubr.f32.gmra.mrb[0].mxu0 %v92
    %v272 = vpop.f32.mrb[0].mxu0
    %v273 = vadd.f32 %v165, %v272
    %v274 = vpop.f32.mrb[0].mxu0
    %v275 = vadd.f32 %v169, %v274
    %276 = vmatprep.mubr.f32.mxu0 0.0
    %277 = vmatmul.mubr.f32.gmra.mrb[0].mxu0 %v93
    %v278 = vpop.f32.mrb[0].mxu0
    %v279 = vadd.f32 %v165, %v278
    %v280 = vpop.f32.mrb[0].mxu0
    %v281 = vadd.f32 %v169, %v280
    %282 = vmatprep.mubr.f32.mxu0 0.0
    %283 = vmatmul.mubr.f32.gmra.mrb[0].mxu0 %v94
    %v284 = vpop.f32.mrb[0].mxu0
    %v285 = vadd.f32 %v165, %v284
    %v286 = vpop.f32.mrb[0].mxu0
    %v287 = vadd.f32 %v169, %v286
    %288 = vmatprep.mubr.f32.mxu0 0.0
    %289 = vmatmul.mubr.f32.gmra.mrb[0].mxu0 %v95
    %v290 = vpop.f32.mrb[0].mxu0
    %v291 = vadd.f32 %v165, %v290
    %v292 = vpop.f32.mrb[0].mxu0
    %v293 = vadd.f32 %v169, %v292
    %294 = vdwg.mxu0
    %295 = vmatprep.subr.mxu0 %v99
    %296 = vmatpush1.msra.mxu0 %v98
    %297 = vmatprep.subr.mxu0 %v103
    %298 = vmatpush1.msra.mxu0 %v102
    %299 = vmatprep.subr.mxu0 %v107
    %300 = vmatpush1.msra.mxu0 %v106
    %301 = vmatprep.subr.mxu0 %v111
    %302 = vmatpush1.msra.mxu0 %v110
    %303 = vmatprep.subr.mxu0 %v115
    %304 = vmatpush1.msra.mxu0 %v114
    %305 = vmatprep.subr.mxu0 %v119
    %306 = vmatpush1.msra.mxu0 %v118
    %307 = vmatprep.subr.mxu0 %v123
    %308 = vmatpush1.msra.mxu0 %v122
    %309 = vmatprep.subr.mxu0 %v127
    %310 = vmatpush1.msra.mxu0 %v126
    %311 = vmatprep.subr.mxu0 %v131
    %312 = vmatpush1.msra.mxu0 %v130
    %313 = vmatprep.subr.mxu0 %v135
    %314 = vmatpush1.msra.mxu0 %v134
    %315 = vmatprep.subr.mxu0 %v139
    %316 = vmatpush1.msra.mxu0 %v138
    %317 = vmatprep.subr.mxu0 %v143
    %318 = vmatpush1.msra.mxu0 %v142
    %319 = vmatprep.subr.mxu0 %v147
    %320 = vmatpush1.msra.mxu0 %v146
    %321 = vmatprep.subr.mxu0 %v151
    %322 = vmatpush1.msra.mxu0 %v150
    %323 = vmatprep.subr.mxu0 %v155
    %324 = vmatpush1.msra.mxu0 %v154
    %325 = vmatprep.subr.mxu0 %v159
    %326 = vmatpush1.msra.mxu0 %v158
    %327 = vmatprep.subr.mxu0 0.0
    %328 = vmatpush1.msra.mxu0 0.0
    %329 = vmatprep.subr.mxu0 0.0
    %330 = vmatpush1.msra.mxu0 0.0
    %331 = vmatprep.subr.mxu0 0.0
    %332 = vmatpush1.msra.mxu0 0.0
    %333 = vmatprep.subr.mxu0 0.0
    %334 = vmatpush1.msra.mxu0 0.0
    %335 = vmatprep.subr.mxu0 0.0
    %336 = vmatpush1.msra.mxu0 0.0
    %337 = vmatprep.subr.mxu0 0.0
    %338 = vmatpush1.msra.mxu0 0.0
    %339 = vmatprep.subr.mxu0 0.0
    %340 = vmatpush1.msra.mxu0 0.0
    %341 = vmatprep.subr.mxu0 0.0
    %342 = vmatpush1.msra.mxu0 0.0
    %343 = vmatprep.subr.mxu0 0.0
    %344 = vmatpush1.msra.mxu0 0.0
    %345 = vmatprep.subr.mxu0 0.0
    %346 = vmatpush1.msra.mxu0 0.0
    %347 = vmatprep.subr.mxu0 0.0
    %348 = vmatpush1.msra.mxu0 0.0
    %349 = vmatprep.subr.mxu0 0.0
    %350 = vmatpush1.msra.mxu0 0.0
    %351 = vmatprep.subr.mxu0 0.0
    %352 = vmatpush1.msra.mxu0 0.0
    %353 = vmatprep.subr.mxu0 0.0
    %354 = vmatpush1.msra.mxu0 0.0
    %355 = vmatprep.subr.mxu0 0.0
    %356 = vmatpush1.msra.mxu0 0.0
    %357 = vmatprep.subr.mxu0 0.0
    %358 = vmatpush1.msra.mxu0 0.0
    %359 = vmatprep.mubr.f32.mxu0 0.0
    %360 = vmatmul.mubr.f32.gmra.mrb[0].mxu0 %v88
    %v361 = vpop.f32.mrb[0].mxu0
    %v362 = vadd.f32 %v173, %v361
    %v363 = vpop.f32.mrb[0].mxu0
    %v364 = vadd.f32 %v177, %v363
    %365 = vmatprep.mubr.f32.mxu0 0.0
    %366 = vmatmul.mubr.f32.gmra.mrb[0].mxu0 %v89
    %v367 = vpop.f32.mrb[0].mxu0
    %v368 = vadd.f32 %v173, %v367
    %v369 = vpop.f32.mrb[0].mxu0
    %v370 = vadd.f32 %v177, %v369
    %371 = vmatprep.mubr.f32.mxu0 0.0
    %372 = vmatmul.mubr.f32.gmra.mrb[0].mxu0 %v90
    %v373 = vpop.f32.mrb[0].mxu0
    %v374 = vadd.f32 %v173, %v373
    %v375 = vpop.f32.mrb[0].mxu0
    %v376 = vadd.f32 %v177, %v375
    %377 = vmatprep.mubr.f32.mxu0 0.0
    %378 = vmatmul.mubr.f32.gmra.mrb[0].mxu0 %v91
    %v379 = vpop.f32.mrb[0].mxu0
    %v380 = vadd.f32 %v173, %v379
    %v381 = vpop.f32.mrb[0].mxu0
    %v382 = vadd.f32 %v177, %v381
    %383 = vmatprep.mubr.f32.mxu0 0.0
    %384 = vmatmul.mubr.f32.gmra.mrb[0].mxu0 %v92
    %v385 = vpop.f32.mrb[0].mxu0
    %v386 = vadd.f32 %v173, %v385
    %v387 = vpop.f32.mrb[0].mxu0
    %v388 = vadd.f32 %v177, %v387
    %389 = vmatprep.mubr.f32.mxu0 0.0
    %390 = vmatmul.mubr.f32.gmra.mrb[0].mxu0 %v93
    %v391 = vpop.f32.mrb[0].mxu0
    %v392 = vadd.f32 %v173, %v391
    %v393 = vpop.f32.mrb[0].mxu0
    %v394 = vadd.f32 %v177, %v393
    %395 = vmatprep.mubr.f32.mxu0 0.0
    %396 = vmatmul.mubr.f32.gmra.mrb[0].mxu0 %v94
    %v397 = vpop.f32.mrb[0].mxu0
    %v398 = vadd.f32 %v173, %v397
    %v399 = vpop.f32.mrb[0].mxu0
    %v400 = vadd.f32 %v177, %v399
    %401 = vmatprep.mubr.f32.mxu0 0.0
    %402 = vmatmul.mubr.f32.gmra.mrb[0].mxu0 %v95
    %v403 = vpop.f32.mrb[0].mxu0
    %v404 = vadd.f32 %v173, %v403
    %v405 = vpop.f32.mrb[0].mxu0
    %v406 = vadd.f32 %v177, %v405
    %407 = vdwg.mxu0
    %408 = vst [vmem:[#allocation4] sm:$0xff] %v249
    %409 = vst [vmem:[#allocation4 + $0x8] sm:$0xff] %v251
    %410 = vst [vmem:[#allocation4 + $0x10] sm:$0xff] %v362
    %411 = vst [vmem:[#allocation4 + $0x18] sm:$0xff] %v364
    %412 = vst [vmem:[#allocation4 + $0x20] sm:$0xff] %v255
    %413 = vst [vmem:[#allocation4 + $0x28] sm:$0xff] %v257
    %414 = vst [vmem:[#allocation4 + $0x30] sm:$0xff] %v368
    %415 = vst [vmem:[#allocation4 + $0x38] sm:$0xff] %v370
    %416 = vst [vmem:[#allocation4 + $0x40] sm:$0xff] %v261
    %417 = vst [vmem:[#allocation4 + $0x48] sm:$0xff] %v263
    %418 = vst [vmem:[#allocation4 + $0x50] sm:$0xff] %v374
    %419 = vst [vmem:[#allocation4 + $0x58] sm:$0xff] %v376
    %420 = vst [vmem:[#allocation4 + $0x60] sm:$0xff] %v267
    %421 = vst [vmem:[#allocation4 + $0x68] sm:$0xff] %v269
    %422 = vst [vmem:[#allocation4 + $0x70] sm:$0xff] %v380
    %423 = vst [vmem:[#allocation4 + $0x78] sm:$0xff] %v382
    %424 = vst [vmem:[#allocation4 + $0x80] sm:$0xff] %v273
    %425 = vst [vmem:[#allocation4 + $0x88] sm:$0xff] %v275
    %426 = vst [vmem:[#allocation4 + $0x90] sm:$0xff] %v386
    %427 = vst [vmem:[#allocation4 + $0x98] sm:$0xff] %v388
    %428 = vst [vmem:[#allocation4 + $0xa0] sm:$0xff] %v279
    %429 = vst [vmem:[#allocation4 + $0xa8] sm:$0xff] %v281
    %430 = vst [vmem:[#allocation4 + $0xb0] sm:$0xff] %v392
    %431 = vst [vmem:[#allocation4 + $0xb8] sm:$0xff] %v394
    %432 = vst [vmem:[#allocation4 + $0xc0] sm:$0xff] %v285
    %433 = vst [vmem:[#allocation4 + $0xc8] sm:$0xff] %v287
    %434 = vst [vmem:[#allocation4 + $0xd0] sm:$0xff] %v398
    %435 = vst [vmem:[#allocation4 + $0xd8] sm:$0xff] %v400
    %436 = vst [vmem:[#allocation4 + $0xe0] sm:$0xff] %v291
    %437 = vst [vmem:[#allocation4 + $0xe8] sm:$0xff] %v293
    %438 = vst [vmem:[#allocation4 + $0xf0] sm:$0xff] %v404
    %439 = vst [vmem:[#allocation4 + $0xf8] sm:$0xff] %v406
    %v440 = vld [vmem:[#allocation10] sm:$0xff]
    %v441 = vld [vmem:[#allocation10 + $0x8] sm:$0xff]
    %v442 = vld [vmem:[#allocation10 + $0x10] sm:$0xff]
    %v443 = vld [vmem:[#allocation10 + $0x18] sm:$0xff]
    %v444 = vld [vmem:[#allocation10 + $0x20] sm:$0xff]
    %v445 = vld [vmem:[#allocation10 + $0x28] sm:$0xff]
    %v446 = vld [vmem:[#allocation10 + $0x30] sm:$0xff]
    %v447 = vld [vmem:[#allocation10 + $0x38] sm:$0xff]
    %v448 = vld [vmem:[#allocation10 + $0x40] sm:$0xff]
    %v449 = vld [vmem:[#allocation10 + $0x48] sm:$0xff]
    %v450 = vld [vmem:[#allocation10 + $0x50] sm:$0xff]
    %v451 = vld [vmem:[#allocation10 + $0x58] sm:$0xff]
    %v452 = vld [vmem:[#allocation10 + $0x60] sm:$0xff]
    %v453 = vld [vmem:[#allocation10 + $0x68] sm:$0xff]
    %v454 = vld [vmem:[#allocation10 + $0x70] sm:$0xff]
    %v455 = vld [vmem:[#allocation10 + $0x78] sm:$0xff]
    %v456 = vld [vmem:[#allocation10 + $0x80] sm:$0xff]
    %v457 = vld [vmem:[#allocation10 + $0x88] sm:$0xff]
    %v458 = vld [vmem:[#allocation10 + $0x90] sm:$0xff]
    %v459 = vld [vmem:[#allocation10 + $0x98] sm:$0xff]
    %v460 = vld [vmem:[#allocation10 + $0xa0] sm:$0xff]
    %v461 = vld [vmem:[#allocation10 + $0xa8] sm:$0xff]
    %v462 = vld [vmem:[#allocation10 + $0xb0] sm:$0xff]
    %v463 = vld [vmem:[#allocation10 + $0xb8] sm:$0xff]
    %v464 = vld [vmem:[#allocation10 + $0xc0] sm:$0xff]
    %v465 = vld [vmem:[#allocation10 + $0xc8] sm:$0xff]
    %v466 = vld [vmem:[#allocation10 + $0xd0] sm:$0xff]
    %v467 = vld [vmem:[#allocation10 + $0xd8] sm:$0xff]
    %v468 = vld [vmem:[#allocation10 + $0xe0] sm:$0xff]
    %v469 = vld [vmem:[#allocation10 + $0xe8] sm:$0xff]
    %v470 = vld [vmem:[#allocation10 + $0xf0] sm:$0xff]
    %v471 = vld [vmem:[#allocation10 + $0xf8] sm:$0xff]
    %v472 = vld [vmem:[#allocation10 + $0x100] sm:$0xff]
    %v473 = vld [vmem:[#allocation10 + $0x108] sm:$0xff]
    %v474 = vld [vmem:[#allocation10 + $0x110] sm:$0xff]
    %v475 = vld [vmem:[#allocation10 + $0x118] sm:$0xff]
    %v476 = vld [vmem:[#allocation10 + $0x120] sm:$0xff]
    %v477 = vld [vmem:[#allocation10 + $0x128] sm:$0xff]
    %v478 = vld [vmem:[#allocation10 + $0x130] sm:$0xff]
    %v479 = vld [vmem:[#allocation10 + $0x138] sm:$0xff]
    %v480 = vld [vmem:[#allocation10 + $0x140] sm:$0xff]
    %v481 = vld [vmem:[#allocation10 + $0x148] sm:$0xff]
    %v482 = vld [vmem:[#allocation10 + $0x150] sm:$0xff]
    %v483 = vld [vmem:[#allocation10 + $0x158] sm:$0xff]
    %v484 = vld [vmem:[#allocation10 + $0x160] sm:$0xff]
    %v485 = vld [vmem:[#allocation10 + $0x168] sm:$0xff]
    %v486 = vld [vmem:[#allocation10 + $0x170] sm:$0xff]
    %v487 = vld [vmem:[#allocation10 + $0x178] sm:$0xff]
    %v488 = vld [vmem:[#allocation10 + $0x180] sm:$0xff]
    %v489 = vld [vmem:[#allocation10 + $0x188] sm:$0xff]
    %v490 = vld [vmem:[#allocation10 + $0x190] sm:$0xff]
    %v491 = vld [vmem:[#allocation10 + $0x198] sm:$0xff]
    %v492 = vld [vmem:[#allocation10 + $0x1a0] sm:$0xff]
    %v493 = vld [vmem:[#allocation10 + $0x1a8] sm:$0xff]
    %v494 = vld [vmem:[#allocation10 + $0x1b0] sm:$0xff]
    %v495 = vld [vmem:[#allocation10 + $0x1b8] sm:$0xff]
    %v496 = vld [vmem:[#allocation10 + $0x1c0] sm:$0xff]
    %v497 = vld [vmem:[#allocation10 + $0x1c8] sm:$0xff]
    %v498 = vld [vmem:[#allocation10 + $0x1d0] sm:$0xff]
    %v499 = vld [vmem:[#allocation10 + $0x1d8] sm:$0xff]
    %v500 = vld [vmem:[#allocation10 + $0x1e0] sm:$0xff]
    %v501 = vld [vmem:[#allocation10 + $0x1e8] sm:$0xff]
    %v502 = vld [vmem:[#allocation10 + $0x1f0] sm:$0xff]
    %v503 = vld [vmem:[#allocation10 + $0x1f8] sm:$0xff]
    %v504 = vld [vmem:[#allocation2] sm:$0xff]
    %v505 = vld [vmem:[#allocation3] sm:$0xff]
    %v506 = vld [vmem:[#allocation4] sm:$0xff]
    %v507 = vld [vmem:[#allocation4 + $0x8] sm:$0xff]
    %v508 = vld [vmem:[#allocation4 + $0x10] sm:$0xff]
    %v509 = vld [vmem:[#allocation4 + $0x18] sm:$0xff]
    %510 = vmatprep.subr.mxu0 %v441
    %511 = vmatpush1.msra.mxu0 %v440
    %512 = vmatprep.subr.mxu0 %v445
    %513 = vmatpush1.msra.mxu0 %v444
    %514 = vmatprep.subr.mxu0 %v449
    %515 = vmatpush1.msra.mxu0 %v448
    %516 = vmatprep.subr.mxu0 %v453
    %517 = vmatpush1.msra.mxu0 %v452
    %518 = vmatprep.subr.mxu0 %v457
    %519 = vmatpush1.msra.mxu0 %v456
    %520 = vmatprep.subr.mxu0 %v461
    %521 = vmatpush1.msra.mxu0 %v460
    %522 = vmatprep.subr.mxu0 %v465
    %523 = vmatpush1.msra.mxu0 %v464
    %524 = vmatprep.subr.mxu0 %v469
    %525 = vmatpush1.msra.mxu0 %v468
    %526 = vmatprep.subr.mxu0 %v473
    %527 = vmatpush1.msra.mxu0 %v472
    %528 = vmatprep.subr.mxu0 %v477
    %529 = vmatpush1.msra.mxu0 %v476
    %530 = vmatprep.subr.mxu0 %v481
    %531 = vmatpush1.msra.mxu0 %v480
    %532 = vmatprep.subr.mxu0 %v485
    %533 = vmatpush1.msra.mxu0 %v484
    %534 = vmatprep.subr.mxu0 %v489
    %535 = vmatpush1.msra.mxu0 %v488
    %536 = vmatprep.subr.mxu0 %v493
    %537 = vmatpush1.msra.mxu0 %v492
    %538 = vmatprep.subr.mxu0 %v497
    %539 = vmatpush1.msra.mxu0 %v496
    %540 = vmatprep.subr.mxu0 %v501
    %541 = vmatpush1.msra.mxu0 %v500
    %542 = vmatprep.subr.mxu0 0.0
    %543 = vmatpush1.msra.mxu0 0.0
    %544 = vmatprep.subr.mxu0 0.0
    %545 = vmatpush1.msra.mxu0 0.0
    %546 = vmatprep.subr.mxu0 0.0
    %547 = vmatpush1.msra.mxu0 0.0
    %548 = vmatprep.subr.mxu0 0.0
    %549 = vmatpush1.msra.mxu0 0.0
    %550 = vmatprep.subr.mxu0 0.0
    %551 = vmatpush1.msra.mxu0 0.0
    %552 = vmatprep.subr.mxu0 0.0
    %553 = vmatpush1.msra.mxu0 0.0
    %554 = vmatprep.subr.mxu0 0.0
    %555 = vmatpush1.msra.mxu0 0.0
    %556 = vmatprep.subr.mxu0 0.0
    %557 = vmatpush1.msra.mxu0 0.0
    %558 = vmatprep.subr.mxu0 0.0
    %559 = vmatpush1.msra.mxu0 0.0
    %560 = vmatprep.subr.mxu0 0.0
    %561 = vmatpush1.msra.mxu0 0.0
    %562 = vmatprep.subr.mxu0 0.0
    %563 = vmatpush1.msra.mxu0 0.0
    %564 = vmatprep.subr.mxu0 0.0
    %565 = vmatpush1.msra.mxu0 0.0
    %566 = vmatprep.subr.mxu0 0.0
    %567 = vmatpush1.msra.mxu0 0.0
    %568 = vmatprep.subr.mxu0 0.0
    %569 = vmatpush1.msra.mxu0 0.0
    %570 = vmatprep.subr.mxu0 0.0
    %571 = vmatpush1.msra.mxu0 0.0
    %572 = vmatprep.subr.mxu0 0.0
    %573 = vmatpush1.msra.mxu0 0.0
    %574 = vmatprep.mubr.f32.mxu0 0.0
    %575 = vmatmul.mubr.f32.gmra.mrb[0].mxu0 %v504
    %v576 = vpop.f32.mrb[0].mxu0
    %v577 = vadd.f32 0.0, %v576
    %v578 = vpop.f32.mrb[0].mxu0
    %v579 = vadd.f32 0.0, %v578
    %580 = vdwg.mxu0
    %581 = vmatprep.subr.mxu0 %v443
    %582 = vmatpush1.msra.mxu0 %v442
    %583 = vmatprep.subr.mxu0 %v447
    %584 = vmatpush1.msra.mxu0 %v446
    %585 = vmatprep.subr.mxu0 %v451
    %586 = vmatpush1.msra.mxu0 %v450
    %587 = vmatprep.subr.mxu0 %v455
    %588 = vmatpush1.msra.mxu0 %v454
    %589 = vmatprep.subr.mxu0 %v459
    %590 = vmatpush1.msra.mxu0 %v458
    %591 = vmatprep.subr.mxu0 %v463
    %592 = vmatpush1.msra.mxu0 %v462
    %593 = vmatprep.subr.mxu0 %v467
    %594 = vmatpush1.msra.mxu0 %v466
    %595 = vmatprep.subr.mxu0 %v471
    %596 = vmatpush1.msra.mxu0 %v470
    %597 = vmatprep.subr.mxu0 %v475
    %598 = vmatpush1.msra.mxu0 %v474
    %599 = vmatprep.subr.mxu0 %v479
    %600 = vmatpush1.msra.mxu0 %v478
    %601 = vmatprep.subr.mxu0 %v483
    %602 = vmatpush1.msra.mxu0 %v482
    %603 = vmatprep.subr.mxu0 %v487
    %604 = vmatpush1.msra.mxu0 %v486
    %605 = vmatprep.subr.mxu0 %v491
    %606 = vmatpush1.msra.mxu0 %v490
    %607 = vmatprep.subr.mxu0 %v495
    %608 = vmatpush1.msra.mxu0 %v494
    %609 = vmatprep.subr.mxu0 %v499
    %610 = vmatpush1.msra.mxu0 %v498
    %611 = vmatprep.subr.mxu0 %v503
    %612 = vmatpush1.msra.mxu0 %v502
    %613 = vmatprep.subr.mxu0 0.0
    %614 = vmatpush1.msra.mxu0 0.0
    %615 = vmatprep.subr.mxu0 0.0
    %616 = vmatpush1.msra.mxu0 0.0
    %617 = vmatprep.subr.mxu0 0.0
    %618 = vmatpush1.msra.mxu0 0.0
    %619 = vmatprep.subr.mxu0 0.0
    %620 = vmatpush1.msra.mxu0 0.0
    %621 = vmatprep.subr.mxu0 0.0
    %622 = vmatpush1.msra.mxu0 0.0
    %623 = vmatprep.subr.mxu0 0.0
    %624 = vmatpush1.msra.mxu0 0.0
    %625 = vmatprep.subr.mxu0 0.0
    %626 = vmatpush1.msra.mxu0 0.0
    %627 = vmatprep.subr.mxu0 0.0
    %628 = vmatpush1.msra.mxu0 0.0
    %629 = vmatprep.subr.mxu0 0.0
    %630 = vmatpush1.msra.mxu0 0.0
    %631 = vmatprep.subr.mxu0 0.0
    %632 = vmatpush1.msra.mxu0 0.0
    %633 = vmatprep.subr.mxu0 0.0
    %634 = vmatpush1.msra.mxu0 0.0
    %635 = vmatprep.subr.mxu0 0.0
    %636 = vmatpush1.msra.mxu0 0.0
    %637 = vmatprep.subr.mxu0 0.0
    %638 = vmatpush1.msra.mxu0 0.0
    %639 = vmatprep.subr.mxu0 0.0
    %640 = vmatpush1.msra.mxu0 0.0
    %641 = vmatprep.subr.mxu0 0.0
    %642 = vmatpush1.msra.mxu0 0.0
    %643 = vmatprep.subr.mxu0 0.0
    %644 = vmatpush1.msra.mxu0 0.0
    %645 = vmatprep.mubr.f32.mxu0 0.0
    %646 = vmatmul.mubr.f32.gmra.mrb[0].mxu0 %v504
    %v647 = vpop.f32.mrb[0].mxu0
    %v648 = vadd.f32 0.0, %v647
    %v649 = vpop.f32.mrb[0].mxu0
    %v650 = vadd.f32 0.0, %v649
    %651 = vdwg.mxu0
    %v652 = vadd.f32 %v506, %v577
    %v653 = vadd.f32 %v507, %v579
    %v654 = vadd.f32 %v508, %v648
    %v655 = vadd.f32 %v509, %v650
    %v656 = vmul.f32 %v652, 0.5
    %v657 = vtanh.pop %v656
    %v658 = vmul.f32 %v657, 0.5
    %v659 = vadd.f32 %v658, 0.5
    %v660 = vmul.f32 %v653, 0.5
    %v661 = vtanh.pop %v660
    %v662 = vmul.f32 %v661, 0.5
    %v663 = vadd.f32 %v662, 0.5
    %v664 = vtanh.pop %v654
    %v665 = vmul.f32 %v655, 0.5
    %v666 = vtanh.pop %v665
    %v667 = vmul.f32 %v666, 0.5
    %v668 = vadd.f32 %v667, 0.5
    %v669 = vmul.f32 %v663, %v505
    %v670 = vmul.f32 %v659, %v664
    %v671 = vadd.f32 %v669, %v670
    %v672 = vtanh.pop %v671
    %v673 = vmul.f32 %v668, %v672
    %674 = vst [vmem:[#allocation13] sm:$0xff] %v673
    %v675 = vld [vmem:[#allocation4 + $0x20] sm:$0xff]
    %v676 = vld [vmem:[#allocation4 + $0x28] sm:$0xff]
    %v677 = vld [vmem:[#allocation4 + $0x30] sm:$0xff]
    %v678 = vld [vmem:[#allocation4 + $0x38] sm:$0xff]
    %679 = vmatprep.subr.mxu0 %v441
    %680 = vmatpush1.msra.mxu0 %v440
    %681 = vmatprep.subr.mxu0 %v445
    %682 = vmatpush1.msra.mxu0 %v444
    %683 = vmatprep.subr.mxu0 %v449
    %684 = vmatpush1.msra.mxu0 %v448
    %685 = vmatprep.subr.mxu0 %v453
    %686 = vmatpush1.msra.mxu0 %v452
    %687 = vmatprep.subr.mxu0 %v457
    %688 = vmatpush1.msra.mxu0 %v456
    %689 = vmatprep.subr.mxu0 %v461
    %690 = vmatpush1.msra.mxu0 %v460
    %691 = vmatprep.subr.mxu0 %v465
    %692 = vmatpush1.msra.mxu0 %v464
    %693 = vmatprep.subr.mxu0 %v469
    %694 = vmatpush1.msra.mxu0 %v468
    %695 = vmatprep.subr.mxu0 %v473
    %696 = vmatpush1.msra.mxu0 %v472
    %697 = vmatprep.subr.mxu0 %v477
    %698 = vmatpush1.msra.mxu0 %v476
    %699 = vmatprep.subr.mxu0 %v481
    %700 = vmatpush1.msra.mxu0 %v480
    %701 = vmatprep.subr.mxu0 %v485
    %702 = vmatpush1.msra.mxu0 %v484
    %703 = vmatprep.subr.mxu0 %v489
    %704 = vmatpush1.msra.mxu0 %v488
    %705 = vmatprep.subr.mxu0 %v493
    %706 = vmatpush1.msra.mxu0 %v492
    %707 = vmatprep.subr.mxu0 %v497
    %708 = vmatpush1.msra.mxu0 %v496
    %709 = vmatprep.subr.mxu0 %v501
    %710 = vmatpush1.msra.mxu0 %v500
    %711 = vmatprep.subr.mxu0 0.0
    %712 = vmatpush1.msra.mxu0 0.0
    %713 = vmatprep.subr.mxu0 0.0
    %714 = vmatpush1.msra.mxu0 0.0
    %715 = vmatprep.subr.mxu0 0.0
    %716 = vmatpush1.msra.mxu0 0.0
    %717 = vmatprep.subr.mxu0 0.0
    %718 = vmatpush1.msra.mxu0 0.0
    %719 = vmatprep.subr.mxu0 0.0
    %720 = vmatpush1.msra.mxu0 0.0
    %721 = vmatprep.subr.mxu0 0.0
    %722 = vmatpush1.msra.mxu0 0.0
    %723 = vmatprep.subr.mxu0 0.0
    %724 = vmatpush1.msra.mxu0 0.0
    %725 = vmatprep.subr.mxu0 0.0
    %726 = vmatpush1.msra.mxu0 0.0
    %727 = vmatprep.subr.mxu0 0.0
    %728 = vmatpush1.msra.mxu0 0.0
    %729 = vmatprep.subr.mxu0 0.0
    %730 = vmatpush1.msra.mxu0 0.0
    %731 = vmatprep.subr.mxu0 0.0
    %732 = vmatpush1.msra.mxu0 0.0
    %733 = vmatprep.subr.mxu0 0.0
    %734 = vmatpush1.msra.mxu0 0.0
    %735 = vmatprep.subr.mxu0 0.0
    %736 = vmatpush1.msra.mxu0 0.0
    %737 = vmatprep.subr.mxu0 0.0
    %738 = vmatpush1.msra.mxu0 0.0
    %739 = vmatprep.subr.mxu0 0.0
    %740 = vmatpush1.msra.mxu0 0.0
    %741 = vmatprep.subr.mxu0 0.0
    %742 = vmatpush1.msra.mxu0 0.0
    %743 = vmatprep.mubr.f32.mxu0 0.0
    %744 = vmatmul.mubr.f32.gmra.mrb[0].mxu0 %v673
    %v745 = vpop.f32.mrb[0].mxu0
    %v746 = vadd.f32 0.0, %v745
    %v747 = vpop.f32.mrb[0].mxu0
    %v748 = vadd.f32 0.0, %v747
    %749 = vdwg.mxu0
    %750 = vmatprep.subr.mxu0 %v443
    %751 = vmatpush1.msra.mxu0 %v442
    %752 = vmatprep.subr.mxu0 %v447
    %753 = vmatpush1.msra.mxu0 %v446
    %754 = vmatprep.subr.mxu0 %v451
    %755 = vmatpush1.msra.mxu0 %v450
    %756 = vmatprep.subr.mxu0 %v455
    %757 = vmatpush1.msra.mxu0 %v454
    %758 = vmatprep.subr.mxu0 %v459
    %759 = vmatpush1.msra.mxu0 %v458
    %760 = vmatprep.subr.mxu0 %v463
    %761 = vmatpush1.msra.mxu0 %v462
    %762 = vmatprep.subr.mxu0 %v467
    %763 = vmatpush1.msra.mxu0 %v466
    %764 = vmatprep.subr.mxu0 %v471
    %765 = vmatpush1.msra.mxu0 %v470
    %766 = vmatprep.subr.mxu0 %v475
    %767 = vmatpush1.msra.mxu0 %v474
    %768 = vmatprep.subr.mxu0 %v479
    %769 = vmatpush1.msra.mxu0 %v478
    %770 = vmatprep.subr.mxu0 %v483
    %771 = vmatpush1.msra.mxu0 %v482
    %772 = vmatprep.subr.mxu0 %v487
    %773 = vmatpush1.msra.mxu0 %v486
    %774 = vmatprep.subr.mxu0 %v491
    %775 = vmatpush1.msra.mxu0 %v490
    %776 = vmatprep.subr.mxu0 %v495
    %777 = vmatpush1.msra.mxu0 %v494
    %778 = vmatprep.subr.mxu0 %v499
    %779 = vmatpush1.msra.mxu0 %v498
    %780 = vmatprep.subr.mxu0 %v503
    %781 = vmatpush1.msra.mxu0 %v502
    %782 = vmatprep.subr.mxu0 0.0
    %783 = vmatpush1.msra.mxu0 0.0
    %784 = vmatprep.subr.mxu0 0.0
    %785 = vmatpush1.msra.mxu0 0.0
    %786 = vmatprep.subr.mxu0 0.0
    %787 = vmatpush1.msra.mxu0 0.0
    %788 = vmatprep.subr.mxu0 0.0
    %789 = vmatpush1.msra.mxu0 0.0
    %790 = vmatprep.subr.mxu0 0.0
    %791 = vmatpush1.msra.mxu0 0.0
    %792 = vmatprep.subr.mxu0 0.0
    %793 = vmatpush1.msra.mxu0 0.0
    %794 = vmatprep.subr.mxu0 0.0
    %795 = vmatpush1.msra.mxu0 0.0
    %796 = vmatprep.subr.mxu0 0.0
    %797 = vmatpush1.msra.mxu0 0.0
    %798 = vmatprep.subr.mxu0 0.0
    %799 = vmatpush1.msra.mxu0 0.0
    %800 = vmatprep.subr.mxu0 0.0
    %801 = vmatpush1.msra.mxu0 0.0
    %802 = vmatprep.subr.mxu0 0.0
    %803 = vmatpush1.msra.mxu0 0.0
    %804 = vmatprep.subr.mxu0 0.0
    %805 = vmatpush1.msra.mxu0 0.0
    %806 = vmatprep.subr.mxu0 0.0
    %807 = vmatpush1.msra.mxu0 0.0
    %808 = vmatprep.subr.mxu0 0.0
    %809 = vmatpush1.msra.mxu0 0.0
    %810 = vmatprep.subr.mxu0 0.0
    %811 = vmatpush1.msra.mxu0 0.0
    %812 = vmatprep.subr.mxu0 0.0
    %813 = vmatpush1.msra.mxu0 0.0
    %814 = vmatprep.mubr.f32.mxu0 0.0
    %815 = vmatmul.mubr.f32.gmra.mrb[0].mxu0 %v673
    %v816 = vpop.f32.mrb[0].mxu0
    %v817 = vadd.f32 0.0, %v816
    %v818 = vpop.f32.mrb[0].mxu0
    %v819 = vadd.f32 0.0, %v818
    %820 = vdwg.mxu0
    %v821 = vadd.f32 %v675, %v746
    %v822 = vadd.f32 %v676, %v748
    %v823 = vadd.f32 %v677, %v817
    %v824 = vadd.f32 %v678, %v819
    %v825 = vmul.f32 %v821, 0.5
    %v826 = vtanh.pop %v825
    %v827 = vmul.f32 %v826, 0.5
    %v828 = vadd.f32 %v827, 0.5
    %v829 = vmul.f32 %v822, 0.5
    %v830 = vtanh.pop %v829
    %v831 = vmul.f32 %v830, 0.5
    %v832 = vadd.f32 %v831, 0.5
    %v833 = vtanh.pop %v823
    %v834 = vmul.f32 %v824, 0.5
    %v835 = vtanh.pop %v834
    %v836 = vmul.f32 %v835, 0.5
    %v837 = vadd.f32 %v836, 0.5
    %v838 = vmul.f32 %v832, %v671
    %v839 = vmul.f32 %v828, %v833
    %v840 = vadd.f32 %v838, %v839
    %v841 = vtanh.pop %v840
    %v842 = vmul.f32 %v837, %v841
    %s843 = scalar_lea.vmem [#allocation13], 8
    %844 = vst [vmem:[%s843] sm:$0xff] %v842
    %v845 = vld [vmem:[#allocation4 + $0x40] sm:$0xff]
    %v846 = vld [vmem:[#allocation4 + $0x48] sm:$0xff]
    %v847 = vld [vmem:[#allocation4 + $0x50] sm:$0xff]
    %v848 = vld [vmem:[#allocation4 + $0x58] sm:$0xff]
    %849 = vmatprep.subr.mxu0 %v441
    %850 = vmatpush1.msra.mxu0 %v440
    %851 = vmatprep.subr.mxu0 %v445
    %852 = vmatpush1.msra.mxu0 %v444
    %853 = vmatprep.subr.mxu0 %v449
    %854 = vmatpush1.msra.mxu0 %v448
    %855 = vmatprep.subr.mxu0 %v453
    %856 = vmatpush1.msra.mxu0 %v452
    %857 = vmatprep.subr.mxu0 %v457
    %858 = vmatpush1.msra.mxu0 %v456
    %859 = vmatprep.subr.mxu0 %v461
    %860 = vmatpush1.msra.mxu0 %v460
    %861 = vmatprep.subr.mxu0 %v465
    %862 = vmatpush1.msra.mxu0 %v464
    %863 = vmatprep.subr.mxu0 %v469
    %864 = vmatpush1.msra.mxu0 %v468
    %865 = vmatprep.subr.mxu0 %v473
    %866 = vmatpush1.msra.mxu0 %v472
    %867 = vmatprep.subr.mxu0 %v477
    %868 = vmatpush1.msra.mxu0 %v476
    %869 = vmatprep.subr.mxu0 %v481
    %870 = vmatpush1.msra.mxu0 %v480
    %871 = vmatprep.subr.mxu0 %v485
    %872 = vmatpush1.msra.mxu0 %v484
    %873 = vmatprep.subr.mxu0 %v489
    %874 = vmatpush1.msra.mxu0 %v488
    %875 = vmatprep.subr.mxu0 %v493
    %876 = vmatpush1.msra.mxu0 %v492
    %877 = vmatprep.subr.mxu0 %v497
    %878 = vmatpush1.msra.mxu0 %v496
    %879 = vmatprep.subr.mxu0 %v501
    %880 = vmatpush1.msra.mxu0 %v500
    %881 = vmatprep.subr.mxu0 0.0
    %882 = vmatpush1.msra.mxu0 0.0
    %883 = vmatprep.subr.mxu0 0.0
    %884 = vmatpush1.msra.mxu0 0.0
    %885 = vmatprep.subr.mxu0 0.0
    %886 = vmatpush1.msra.mxu0 0.0
    %887 = vmatprep.subr.mxu0 0.0
    %888 = vmatpush1.msra.mxu0 0.0
    %889 = vmatprep.subr.mxu0 0.0
    %890 = vmatpush1.msra.mxu0 0.0
    %891 = vmatprep.subr.mxu0 0.0
    %892 = vmatpush1.msra.mxu0 0.0
    %893 = vmatprep.subr.mxu0 0.0
    %894 = vmatpush1.msra.mxu0 0.0
    %895 = vmatprep.subr.mxu0 0.0
    %896 = vmatpush1.msra.mxu0 0.0
    %897 = vmatprep.subr.mxu0 0.0
    %898 = vmatpush1.msra.mxu0 0.0
    %899 = vmatprep.subr.mxu0 0.0
    %900 = vmatpush1.msra.mxu0 0.0
    %901 = vmatprep.subr.mxu0 0.0
    %902 = vmatpush1.msra.mxu0 0.0
    %903 = vmatprep.subr.mxu0 0.0
    %904 = vmatpush1.msra.mxu0 0.0
    %905 = vmatprep.subr.mxu0 0.0
    %906 = vmatpush1.msra.mxu0 0.0
    %907 = vmatprep.subr.mxu0 0.0
    %908 = vmatpush1.msra.mxu0 0.0
    %909 = vmatprep.subr.mxu0 0.0
    %910 = vmatpush1.msra.mxu0 0.0
    %911 = vmatprep.subr.mxu0 0.0
    %912 = vmatpush1.msra.mxu0 0.0
    %913 = vmatprep.mubr.f32.mxu0 0.0
    %914 = vmatmul.mubr.f32.gmra.mrb[0].mxu0 %v842
    %v915 = vpop.f32.mrb[0].mxu0
    %v916 = vadd.f32 0.0, %v915
    %v917 = vpop.f32.mrb[0].mxu0
    %v918 = vadd.f32 0.0, %v917
    %919 = vdwg.mxu0
    %920 = vmatprep.subr.mxu0 %v443
    %921 = vmatpush1.msra.mxu0 %v442
    %922 = vmatprep.subr.mxu0 %v447
    %923 = vmatpush1.msra.mxu0 %v446
    %924 = vmatprep.subr.mxu0 %v451
    %925 = vmatpush1.msra.mxu0 %v450
    %926 = vmatprep.subr.mxu0 %v455
    %927 = vmatpush1.msra.mxu0 %v454
    %928 = vmatprep.subr.mxu0 %v459
    %929 = vmatpush1.msra.mxu0 %v458
    %930 = vmatprep.subr.mxu0 %v463
    %931 = vmatpush1.msra.mxu0 %v462
    %932 = vmatprep.subr.mxu0 %v467
    %933 = vmatpush1.msra.mxu0 %v466
    %934 = vmatprep.subr.mxu0 %v471
    %935 = vmatpush1.msra.mxu0 %v470
    %936 = vmatprep.subr.mxu0 %v475
    %937 = vmatpush1.msra.mxu0 %v474
    %938 = vmatprep.subr.mxu0 %v479
    %939 = vmatpush1.msra.mxu0 %v478
    %940 = vmatprep.subr.mxu0 %v483
    %941 = vmatpush1.msra.mxu0 %v482
    %942 = vmatprep.subr.mxu0 %v487
    %943 = vmatpush1.msra.mxu0 %v486
    %944 = vmatprep.subr.mxu0 %v491
    %945 = vmatpush1.msra.mxu0 %v490
    %946 = vmatprep.subr.mxu0 %v495
    %947 = vmatpush1.msra.mxu0 %v494
    %948 = vmatprep.subr.mxu0 %v499
    %949 = vmatpush1.msra.mxu0 %v498
    %950 = vmatprep.subr.mxu0 %v503
    %951 = vmatpush1.msra.mxu0 %v502
    %952 = vmatprep.subr.mxu0 0.0
    %953 = vmatpush1.msra.mxu0 0.0
    %954 = vmatprep.subr.mxu0 0.0
    %955 = vmatpush1.msra.mxu0 0.0
    %956 = vmatprep.subr.mxu0 0.0
    %957 = vmatpush1.msra.mxu0 0.0
    %958 = vmatprep.subr.mxu0 0.0
    %959 = vmatpush1.msra.mxu0 0.0
    %960 = vmatprep.subr.mxu0 0.0
    %961 = vmatpush1.msra.mxu0 0.0
    %962 = vmatprep.subr.mxu0 0.0
    %963 = vmatpush1.msra.mxu0 0.0
    %964 = vmatprep.subr.mxu0 0.0
    %965 = vmatpush1.msra.mxu0 0.0
    %966 = vmatprep.subr.mxu0 0.0
    %967 = vmatpush1.msra.mxu0 0.0
    %968 = vmatprep.subr.mxu0 0.0
    %969 = vmatpush1.msra.mxu0 0.0
    %970 = vmatprep.subr.mxu0 0.0
    %971 = vmatpush1.msra.mxu0 0.0
    %972 = vmatprep.subr.mxu0 0.0
    %973 = vmatpush1.msra.mxu0 0.0
    %974 = vmatprep.subr.mxu0 0.0
    %975 = vmatpush1.msra.mxu0 0.0
    %976 = vmatprep.subr.mxu0 0.0
    %977 = vmatpush1.msra.mxu0 0.0
    %978 = vmatprep.subr.mxu0 0.0
    %979 = vmatpush1.msra.mxu0 0.0
    %980 = vmatprep.subr.mxu0 0.0
    %981 = vmatpush1.msra.mxu0 0.0
    %982 = vmatprep.subr.mxu0 0.0
    %983 = vmatpush1.msra.mxu0 0.0
    %984 = vmatprep.mubr.f32.mxu0 0.0
    %985 = vmatmul.mubr.f32.gmra.mrb[0].mxu0 %v842
    %v986 = vpop.f32.mrb[0].mxu0
    %v987 = vadd.f32 0.0, %v986
    %v988 = vpop.f32.mrb[0].mxu0
    %v989 = vadd.f32 0.0, %v988
    %990 = vdwg.mxu0
    %v991 = vadd.f32 %v845, %v916
    %v992 = vadd.f32 %v846, %v918
    %v993 = vadd.f32 %v847, %v987
    %v994 = vadd.f32 %v848, %v989
    %v995 = vmul.f32 %v991, 0.5
    %v996 = vtanh.pop %v995
    %v997 = vmul.f32 %v996, 0.5
    %v998 = vadd.f32 %v997, 0.5
    %v999 = vmul.f32 %v992, 0.5
    %v1000 = vtanh.pop %v999
    %v1001 = vmul.f32 %v1000, 0.5
    %v1002 = vadd.f32 %v1001, 0.5
    %v1003 = vtanh.pop %v993
    %v1004 = vmul.f32 %v994, 0.5
    %v1005 = vtanh.pop %v1004
    %v1006 = vmul.f32 %v1005, 0.5
    %v1007 = vadd.f32 %v1006, 0.5
    %v1008 = vmul.f32 %v1002, %v840
    %v1009 = vmul.f32 %v998, %v1003
    %v1010 = vadd.f32 %v1008, %v1009
    %v1011 = vtanh.pop %v1010
    %v1012 = vmul.f32 %v1007, %v1011
    %s1013 = scalar_lea.vmem [#allocation13], 16
    %1014 = vst [vmem:[%s1013] sm:$0xff] %v1012
    %v1015 = vld [vmem:[#allocation4 + $0x60] sm:$0xff]
    %v1016 = vld [vmem:[#allocation4 + $0x68] sm:$0xff]
    %v1017 = vld [vmem:[#allocation4 + $0x70] sm:$0xff]
    %v1018 = vld [vmem:[#allocation4 + $0x78] sm:$0xff]
    %1019 = vmatprep.subr.mxu0 %v441
    %1020 = vmatpush1.msra.mxu0 %v440
    %1021 = vmatprep.subr.mxu0 %v445
    %1022 = vmatpush1.msra.mxu0 %v444
    %1023 = vmatprep.subr.mxu0 %v449
    %1024 = vmatpush1.msra.mxu0 %v448
    %1025 = vmatprep.subr.mxu0 %v453
    %1026 = vmatpush1.msra.mxu0 %v452
    %1027 = vmatprep.subr.mxu0 %v457
    %1028 = vmatpush1.msra.mxu0 %v456
    %1029 = vmatprep.subr.mxu0 %v461
    %1030 = vmatpush1.msra.mxu0 %v460
    %1031 = vmatprep.subr.mxu0 %v465
    %1032 = vmatpush1.msra.mxu0 %v464
    %1033 = vmatprep.subr.mxu0 %v469
    %1034 = vmatpush1.msra.mxu0 %v468
    %1035 = vmatprep.subr.mxu0 %v473
    %1036 = vmatpush1.msra.mxu0 %v472
    %1037 = vmatprep.subr.mxu0 %v477
    %1038 = vmatpush1.msra.mxu0 %v476
    %1039 = vmatprep.subr.mxu0 %v481
    %1040 = vmatpush1.msra.mxu0 %v480
    %1041 = vmatprep.subr.mxu0 %v485
    %1042 = vmatpush1.msra.mxu0 %v484
    %1043 = vmatprep.subr.mxu0 %v489
    %1044 = vmatpush1.msra.mxu0 %v488
    %1045 = vmatprep.subr.mxu0 %v493
    %1046 = vmatpush1.msra.mxu0 %v492
    %1047 = vmatprep.subr.mxu0 %v497
    %1048 = vmatpush1.msra.mxu0 %v496
    %1049 = vmatprep.subr.mxu0 %v501
    %1050 = vmatpush1.msra.mxu0 %v500
    %1051 = vmatprep.subr.mxu0 0.0
    %1052 = vmatpush1.msra.mxu0 0.0
    %1053 = vmatprep.subr.mxu0 0.0
    %1054 = vmatpush1.msra.mxu0 0.0
    %1055 = vmatprep.subr.mxu0 0.0
    %1056 = vmatpush1.msra.mxu0 0.0
    %1057 = vmatprep.subr.mxu0 0.0
    %1058 = vmatpush1.msra.mxu0 0.0
    %1059 = vmatprep.subr.mxu0 0.0
    %1060 = vmatpush1.msra.mxu0 0.0
    %1061 = vmatprep.subr.mxu0 0.0
    %1062 = vmatpush1.msra.mxu0 0.0
    %1063 = vmatprep.subr.mxu0 0.0
    %1064 = vmatpush1.msra.mxu0 0.0
    %1065 = vmatprep.subr.mxu0 0.0
    %1066 = vmatpush1.msra.mxu0 0.0
    %1067 = vmatprep.subr.mxu0 0.0
    %1068 = vmatpush1.msra.mxu0 0.0
    %1069 = vmatprep.subr.mxu0 0.0
    %1070 = vmatpush1.msra.mxu0 0.0
    %1071 = vmatprep.subr.mxu0 0.0
    %1072 = vmatpush1.msra.mxu0 0.0
    %1073 = vmatprep.subr.mxu0 0.0
    %1074 = vmatpush1.msra.mxu0 0.0
    %1075 = vmatprep.subr.mxu0 0.0
    %1076 = vmatpush1.msra.mxu0 0.0
    %1077 = vmatprep.subr.mxu0 0.0
    %1078 = vmatpush1.msra.mxu0 0.0
    %1079 = vmatprep.subr.mxu0 0.0
    %1080 = vmatpush1.msra.mxu0 0.0
    %1081 = vmatprep.subr.mxu0 0.0
    %1082 = vmatpush1.msra.mxu0 0.0
    %1083 = vmatprep.mubr.f32.mxu0 0.0
    %1084 = vmatmul.mubr.f32.gmra.mrb[0].mxu0 %v1012
    %v1085 = vpop.f32.mrb[0].mxu0
    %v1086 = vadd.f32 0.0, %v1085
    %v1087 = vpop.f32.mrb[0].mxu0
    %v1088 = vadd.f32 0.0, %v1087
    %1089 = vdwg.mxu0
    %1090 = vmatprep.subr.mxu0 %v443
    %1091 = vmatpush1.msra.mxu0 %v442
    %1092 = vmatprep.subr.mxu0 %v447
    %1093 = vmatpush1.msra.mxu0 %v446
    %1094 = vmatprep.subr.mxu0 %v451
    %1095 = vmatpush1.msra.mxu0 %v450
    %1096 = vmatprep.subr.mxu0 %v455
    %1097 = vmatpush1.msra.mxu0 %v454
    %1098 = vmatprep.subr.mxu0 %v459
    %1099 = vmatpush1.msra.mxu0 %v458
    %1100 = vmatprep.subr.mxu0 %v463
    %1101 = vmatpush1.msra.mxu0 %v462
    %1102 = vmatprep.subr.mxu0 %v467
    %1103 = vmatpush1.msra.mxu0 %v466
    %1104 = vmatprep.subr.mxu0 %v471
    %1105 = vmatpush1.msra.mxu0 %v470
    %1106 = vmatprep.subr.mxu0 %v475
    %1107 = vmatpush1.msra.mxu0 %v474
    %1108 = vmatprep.subr.mxu0 %v479
    %1109 = vmatpush1.msra.mxu0 %v478
    %1110 = vmatprep.subr.mxu0 %v483
    %1111 = vmatpush1.msra.mxu0 %v482
    %1112 = vmatprep.subr.mxu0 %v487
    %1113 = vmatpush1.msra.mxu0 %v486
    %1114 = vmatprep.subr.mxu0 %v491
    %1115 = vmatpush1.msra.mxu0 %v490
    %1116 = vmatprep.subr.mxu0 %v495
    %1117 = vmatpush1.msra.mxu0 %v494
    %1118 = vmatprep.subr.mxu0 %v499
    %1119 = vmatpush1.msra.mxu0 %v498
    %1120 = vmatprep.subr.mxu0 %v503
    %1121 = vmatpush1.msra.mxu0 %v502
    %1122 = vmatprep.subr.mxu0 0.0
    %1123 = vmatpush1.msra.mxu0 0.0
    %1124 = vmatprep.subr.mxu0 0.0
    %1125 = vmatpush1.msra.mxu0 0.0
    %1126 = vmatprep.subr.mxu0 0.0
    %1127 = vmatpush1.msra.mxu0 0.0
    %1128 = vmatprep.subr.mxu0 0.0
    %1129 = vmatpush1.msra.mxu0 0.0
    %1130 = vmatprep.subr.mxu0 0.0
    %1131 = vmatpush1.msra.mxu0 0.0
    %1132 = vmatprep.subr.mxu0 0.0
    %1133 = vmatpush1.msra.mxu0 0.0
    %1134 = vmatprep.subr.mxu0 0.0
    %1135 = vmatpush1.msra.mxu0 0.0
    %1136 = vmatprep.subr.mxu0 0.0
    %1137 = vmatpush1.msra.mxu0 0.0
    %1138 = vmatprep.subr.mxu0 0.0
    %1139 = vmatpush1.msra.mxu0 0.0
    %1140 = vmatprep.subr.mxu0 0.0
    %1141 = vmatpush1.msra.mxu0 0.0
    %1142 = vmatprep.subr.mxu0 0.0
    %1143 = vmatpush1.msra.mxu0 0.0
    %1144 = vmatprep.subr.mxu0 0.0
    %1145 = vmatpush1.msra.mxu0 0.0
    %1146 = vmatprep.subr.mxu0 0.0
    %1147 = vmatpush1.msra.mxu0 0.0
    %1148 = vmatprep.subr.mxu0 0.0
    %1149 = vmatpush1.msra.mxu0 0.0
    %1150 = vmatprep.subr.mxu0 0.0
    %1151 = vmatpush1.msra.mxu0 0.0
    %1152 = vmatprep.subr.mxu0 0.0
    %1153 = vmatpush1.msra.mxu0 0.0
    %1154 = vmatprep.mubr.f32.mxu0 0.0
    %1155 = vmatmul.mubr.f32.gmra.mrb[0].mxu0 %v1012
    %v1156 = vpop.f32.mrb[0].mxu0
    %v1157 = vadd.f32 0.0, %v1156
    %v1158 = vpop.f32.mrb[0].mxu0
    %v1159 = vadd.f32 0.0, %v1158
    %1160 = vdwg.mxu0
    %v1161 = vadd.f32 %v1015, %v1086
    %v1162 = vadd.f32 %v1016, %v1088
    %v1163 = vadd.f32 %v1017, %v1157
    %v1164 = vadd.f32 %v1018, %v1159
    %v1165 = vmul.f32 %v1161, 0.5
    %v1166 = vtanh.pop %v1165
    %v1167 = vmul.f32 %v1166, 0.5
    %v1168 = vadd.f32 %v1167, 0.5
    %v1169 = vmul.f32 %v1162, 0.5
    %v1170 = vtanh.pop %v1169
    %v1171 = vmul.f32 %v1170, 0.5
    %v1172 = vadd.f32 %v1171, 0.5
    %v1173 = vtanh.pop %v1163
    %v1174 = vmul.f32 %v1164, 0.5
    %v1175 = vtanh.pop %v1174
    %v1176 = vmul.f32 %v1175, 0.5
    %v1177 = vadd.f32 %v1176, 0.5
    %v1178 = vmul.f32 %v1172, %v1010
    %v1179 = vmul.f32 %v1168, %v1173
    %v1180 = vadd.f32 %v1178, %v1179
    %v1181 = vtanh.pop %v1180
    %v1182 = vmul.f32 %v1177, %v1181
    %s1183 = scalar_lea.vmem [#allocation13], 24
    %1184 = vst [vmem:[%s1183] sm:$0xff] %v1182
    %v1185 = vld [vmem:[#allocation4 + $0x80] sm:$0xff]
    %v1186 = vld [vmem:[#allocation4 + $0x88] sm:$0xff]
    %v1187 = vld [vmem:[#allocation4 + $0x90] sm:$0xff]
    %v1188 = vld [vmem:[#allocation4 + $0x98] sm:$0xff]
    %1189 = vmatprep.subr.mxu0 %v441
    %1190 = vmatpush1.msra.mxu0 %v440
    %1191 = vmatprep.subr.mxu0 %v445
    %1192 = vmatpush1.msra.mxu0 %v444
    %1193 = vmatprep.subr.mxu0 %v449
    %1194 = vmatpush1.msra.mxu0 %v448
    %1195 = vmatprep.subr.mxu0 %v453
    %1196 = vmatpush1.msra.mxu0 %v452
    %1197 = vmatprep.subr.mxu0 %v457
    %1198 = vmatpush1.msra.mxu0 %v456
    %1199 = vmatprep.subr.mxu0 %v461
    %1200 = vmatpush1.msra.mxu0 %v460
    %1201 = vmatprep.subr.mxu0 %v465
    %1202 = vmatpush1.msra.mxu0 %v464
    %1203 = vmatprep.subr.mxu0 %v469
    %1204 = vmatpush1.msra.mxu0 %v468
    %1205 = vmatprep.subr.mxu0 %v473
    %1206 = vmatpush1.msra.mxu0 %v472
    %1207 = vmatprep.subr.mxu0 %v477
    %1208 = vmatpush1.msra.mxu0 %v476
    %1209 = vmatprep.subr.mxu0 %v481
    %1210 = vmatpush1.msra.mxu0 %v480
    %1211 = vmatprep.subr.mxu0 %v485
    %1212 = vmatpush1.msra.mxu0 %v484
    %1213 = vmatprep.subr.mxu0 %v489
    %1214 = vmatpush1.msra.mxu0 %v488
    %1215 = vmatprep.subr.mxu0 %v493
    %1216 = vmatpush1.msra.mxu0 %v492
    %1217 = vmatprep.subr.mxu0 %v497
    %1218 = vmatpush1.msra.mxu0 %v496
    %1219 = vmatprep.subr.mxu0 %v501
    %1220 = vmatpush1.msra.mxu0 %v500
    %1221 = vmatprep.subr.mxu0 0.0
    %1222 = vmatpush1.msra.mxu0 0.0
    %1223 = vmatprep.subr.mxu0 0.0
    %1224 = vmatpush1.msra.mxu0 0.0
    %1225 = vmatprep.subr.mxu0 0.0
    %1226 = vmatpush1.msra.mxu0 0.0
    %1227 = vmatprep.subr.mxu0 0.0
    %1228 = vmatpush1.msra.mxu0 0.0
    %1229 = vmatprep.subr.mxu0 0.0
    %1230 = vmatpush1.msra.mxu0 0.0
    %1231 = vmatprep.subr.mxu0 0.0
    %1232 = vmatpush1.msra.mxu0 0.0
    %1233 = vmatprep.subr.mxu0 0.0
    %1234 = vmatpush1.msra.mxu0 0.0
    %1235 = vmatprep.subr.mxu0 0.0
    %1236 = vmatpush1.msra.mxu0 0.0
    %1237 = vmatprep.subr.mxu0 0.0
    %1238 = vmatpush1.msra.mxu0 0.0
    %1239 = vmatprep.subr.mxu0 0.0
    %1240 = vmatpush1.msra.mxu0 0.0
    %1241 = vmatprep.subr.mxu0 0.0
    %1242 = vmatpush1.msra.mxu0 0.0
    %1243 = vmatprep.subr.mxu0 0.0
    %1244 = vmatpush1.msra.mxu0 0.0
    %1245 = vmatprep.subr.mxu0 0.0
    %1246 = vmatpush1.msra.mxu0 0.0
    %1247 = vmatprep.subr.mxu0 0.0
    %1248 = vmatpush1.msra.mxu0 0.0
    %1249 = vmatprep.subr.mxu0 0.0
    %1250 = vmatpush1.msra.mxu0 0.0
    %1251 = vmatprep.subr.mxu0 0.0
    %1252 = vmatpush1.msra.mxu0 0.0
    %1253 = vmatprep.mubr.f32.mxu0 0.0
    %1254 = vmatmul.mubr.f32.gmra.mrb[0].mxu0 %v1182
    %v1255 = vpop.f32.mrb[0].mxu0
    %v1256 = vadd.f32 0.0, %v1255
    %v1257 = vpop.f32.mrb[0].mxu0
    %v1258 = vadd.f32 0.0, %v1257
    %1259 = vdwg.mxu0
    %1260 = vmatprep.subr.mxu0 %v443
    %1261 = vmatpush1.msra.mxu0 %v442
    %1262 = vmatprep.subr.mxu0 %v447
    %1263 = vmatpush1.msra.mxu0 %v446
    %1264 = vmatprep.subr.mxu0 %v451
    %1265 = vmatpush1.msra.mxu0 %v450
    %1266 = vmatprep.subr.mxu0 %v455
    %1267 = vmatpush1.msra.mxu0 %v454
    %1268 = vmatprep.subr.mxu0 %v459
    %1269 = vmatpush1.msra.mxu0 %v458
    %1270 = vmatprep.subr.mxu0 %v463
    %1271 = vmatpush1.msra.mxu0 %v462
    %1272 = vmatprep.subr.mxu0 %v467
    %1273 = vmatpush1.msra.mxu0 %v466
    %1274 = vmatprep.subr.mxu0 %v471
    %1275 = vmatpush1.msra.mxu0 %v470
    %1276 = vmatprep.subr.mxu0 %v475
    %1277 = vmatpush1.msra.mxu0 %v474
    %1278 = vmatprep.subr.mxu0 %v479
    %1279 = vmatpush1.msra.mxu0 %v478
    %1280 = vmatprep.subr.mxu0 %v483
    %1281 = vmatpush1.msra.mxu0 %v482
    %1282 = vmatprep.subr.mxu0 %v487
    %1283 = vmatpush1.msra.mxu0 %v486
    %1284 = vmatprep.subr.mxu0 %v491
    %1285 = vmatpush1.msra.mxu0 %v490
    %1286 = vmatprep.subr.mxu0 %v495
    %1287 = vmatpush1.msra.mxu0 %v494
    %1288 = vmatprep.subr.mxu0 %v499
    %1289 = vmatpush1.msra.mxu0 %v498
    %1290 = vmatprep.subr.mxu0 %v503
    %1291 = vmatpush1.msra.mxu0 %v502
    %1292 = vmatprep.subr.mxu0 0.0
    %1293 = vmatpush1.msra.mxu0 0.0
    %1294 = vmatprep.subr.mxu0 0.0
    %1295 = vmatpush1.msra.mxu0 0.0
    %1296 = vmatprep.subr.mxu0 0.0
    %1297 = vmatpush1.msra.mxu0 0.0
    %1298 = vmatprep.subr.mxu0 0.0
    %1299 = vmatpush1.msra.mxu0 0.0
    %1300 = vmatprep.subr.mxu0 0.0
    %1301 = vmatpush1.msra.mxu0 0.0
    %1302 = vmatprep.subr.mxu0 0.0
    %1303 = vmatpush1.msra.mxu0 0.0
    %1304 = vmatprep.subr.mxu0 0.0
    %1305 = vmatpush1.msra.mxu0 0.0
    %1306 = vmatprep.subr.mxu0 0.0
    %1307 = vmatpush1.msra.mxu0 0.0
    %1308 = vmatprep.subr.mxu0 0.0
    %1309 = vmatpush1.msra.mxu0 0.0
    %1310 = vmatprep.subr.mxu0 0.0
    %1311 = vmatpush1.msra.mxu0 0.0
    %1312 = vmatprep.subr.mxu0 0.0
    %1313 = vmatpush1.msra.mxu0 0.0
    %1314 = vmatprep.subr.mxu0 0.0
    %1315 = vmatpush1.msra.mxu0 0.0
    %1316 = vmatprep.subr.mxu0 0.0
    %1317 = vmatpush1.msra.mxu0 0.0
    %1318 = vmatprep.subr.mxu0 0.0
    %1319 = vmatpush1.msra.mxu0 0.0
    %1320 = vmatprep.subr.mxu0 0.0
    %1321 = vmatpush1.msra.mxu0 0.0
    %1322 = vmatprep.subr.mxu0 0.0
    %1323 = vmatpush1.msra.mxu0 0.0
    %1324 = vmatprep.mubr.f32.mxu0 0.0
    %1325 = vmatmul.mubr.f32.gmra.mrb[0].mxu0 %v1182
    %v1326 = vpop.f32.mrb[0].mxu0
    %v1327 = vadd.f32 0.0, %v1326
    %v1328 = vpop.f32.mrb[0].mxu0
    %v1329 = vadd.f32 0.0, %v1328
    %1330 = vdwg.mxu0
    %v1331 = vadd.f32 %v1185, %v1256
    %v1332 = vadd.f32 %v1186, %v1258
    %v1333 = vadd.f32 %v1187, %v1327
    %v1334 = vadd.f32 %v1188, %v1329
    %v1335 = vmul.f32 %v1331, 0.5
    %v1336 = vtanh.pop %v1335
    %v1337 = vmul.f32 %v1336, 0.5
    %v1338 = vadd.f32 %v1337, 0.5
    %v1339 = vmul.f32 %v1332, 0.5
    %v1340 = vtanh.pop %v1339
    %v1341 = vmul.f32 %v1340, 0.5
    %v1342 = vadd.f32 %v1341, 0.5
    %v1343 = vtanh.pop %v1333
    %v1344 = vmul.f32 %v1334, 0.5
    %v1345 = vtanh.pop %v1344
    %v1346 = vmul.f32 %v1345, 0.5
    %v1347 = vadd.f32 %v1346, 0.5
    %v1348 = vmul.f32 %v1342, %v1180
    %v1349 = vmul.f32 %v1338, %v1343
    %v1350 = vadd.f32 %v1348, %v1349
    %v1351 = vtanh.pop %v1350
    %v1352 = vmul.f32 %v1347, %v1351
    %s1353 = scalar_lea.vmem [#allocation13], 32
    %1354 = vst [vmem:[%s1353] sm:$0xff] %v1352
    %v1355 = vld [vmem:[#allocation4 + $0xa0] sm:$0xff]
    %v1356 = vld [vmem:[#allocation4 + $0xa8] sm:$0xff]
    %v1357 = vld [vmem:[#allocation4 + $0xb0] sm:$0xff]
    %v1358 = vld [vmem:[#allocation4 + $0xb8] sm:$0xff]
    %1359 = vmatprep.subr.mxu0 %v441
    %1360 = vmatpush1.msra.mxu0 %v440
    %1361 = vmatprep.subr.mxu0 %v445
    %1362 = vmatpush1.msra.mxu0 %v444
    %1363 = vmatprep.subr.mxu0 %v449
    %1364 = vmatpush1.msra.mxu0 %v448
    %1365 = vmatprep.subr.mxu0 %v453
    %1366 = vmatpush1.msra.mxu0 %v452
    %1367 = vmatprep.subr.mxu0 %v457
    %1368 = vmatpush1.msra.mxu0 %v456
    %1369 = vmatprep.subr.mxu0 %v461
    %1370 = vmatpush1.msra.mxu0 %v460
    %1371 = vmatprep.subr.mxu0 %v465
    %1372 = vmatpush1.msra.mxu0 %v464
    %1373 = vmatprep.subr.mxu0 %v469
    %1374 = vmatpush1.msra.mxu0 %v468
    %1375 = vmatprep.subr.mxu0 %v473
    %1376 = vmatpush1.msra.mxu0 %v472
    %1377 = vmatprep.subr.mxu0 %v477
    %1378 = vmatpush1.msra.mxu0 %v476
    %1379 = vmatprep.subr.mxu0 %v481
    %1380 = vmatpush1.msra.mxu0 %v480
    %1381 = vmatprep.subr.mxu0 %v485
    %1382 = vmatpush1.msra.mxu0 %v484
    %1383 = vmatprep.subr.mxu0 %v489
    %1384 = vmatpush1.msra.mxu0 %v488
    %1385 = vmatprep.subr.mxu0 %v493
    %1386 = vmatpush1.msra.mxu0 %v492
    %1387 = vmatprep.subr.mxu0 %v497
    %1388 = vmatpush1.msra.mxu0 %v496
    %1389 = vmatprep.subr.mxu0 %v501
    %1390 = vmatpush1.msra.mxu0 %v500
    %1391 = vmatprep.subr.mxu0 0.0
    %1392 = vmatpush1.msra.mxu0 0.0
    %1393 = vmatprep.subr.mxu0 0.0
    %1394 = vmatpush1.msra.mxu0 0.0
    %1395 = vmatprep.subr.mxu0 0.0
    %1396 = vmatpush1.msra.mxu0 0.0
    %1397 = vmatprep.subr.mxu0 0.0
    %1398 = vmatpush1.msra.mxu0 0.0
    %1399 = vmatprep.subr.mxu0 0.0
    %1400 = vmatpush1.msra.mxu0 0.0
    %1401 = vmatprep.subr.mxu0 0.0
    %1402 = vmatpush1.msra.mxu0 0.0
    %1403 = vmatprep.subr.mxu0 0.0
    %1404 = vmatpush1.msra.mxu0 0.0
    %1405 = vmatprep.subr.mxu0 0.0
    %1406 = vmatpush1.msra.mxu0 0.0
    %1407 = vmatprep.subr.mxu0 0.0
    %1408 = vmatpush1.msra.mxu0 0.0
    %1409 = vmatprep.subr.mxu0 0.0
    %1410 = vmatpush1.msra.mxu0 0.0
    %1411 = vmatprep.subr.mxu0 0.0
    %1412 = vmatpush1.msra.mxu0 0.0
    %1413 = vmatprep.subr.mxu0 0.0
    %1414 = vmatpush1.msra.mxu0 0.0
    %1415 = vmatprep.subr.mxu0 0.0
    %1416 = vmatpush1.msra.mxu0 0.0
    %1417 = vmatprep.subr.mxu0 0.0
    %1418 = vmatpush1.msra.mxu0 0.0
    %1419 = vmatprep.subr.mxu0 0.0
    %1420 = vmatpush1.msra.mxu0 0.0
    %1421 = vmatprep.subr.mxu0 0.0
    %1422 = vmatpush1.msra.mxu0 0.0
    %1423 = vmatprep.mubr.f32.mxu0 0.0
    %1424 = vmatmul.mubr.f32.gmra.mrb[0].mxu0 %v1352
    %v1425 = vpop.f32.mrb[0].mxu0
    %v1426 = vadd.f32 0.0, %v1425
    %v1427 = vpop.f32.mrb[0].mxu0
    %v1428 = vadd.f32 0.0, %v1427
    %1429 = vdwg.mxu0
    %1430 = vmatprep.subr.mxu0 %v443
    %1431 = vmatpush1.msra.mxu0 %v442
    %1432 = vmatprep.subr.mxu0 %v447
    %1433 = vmatpush1.msra.mxu0 %v446
    %1434 = vmatprep.subr.mxu0 %v451
    %1435 = vmatpush1.msra.mxu0 %v450
    %1436 = vmatprep.subr.mxu0 %v455
    %1437 = vmatpush1.msra.mxu0 %v454
    %1438 = vmatprep.subr.mxu0 %v459
    %1439 = vmatpush1.msra.mxu0 %v458
    %1440 = vmatprep.subr.mxu0 %v463
    %1441 = vmatpush1.msra.mxu0 %v462
    %1442 = vmatprep.subr.mxu0 %v467
    %1443 = vmatpush1.msra.mxu0 %v466
    %1444 = vmatprep.subr.mxu0 %v471
    %1445 = vmatpush1.msra.mxu0 %v470
    %1446 = vmatprep.subr.mxu0 %v475
    %1447 = vmatpush1.msra.mxu0 %v474
    %1448 = vmatprep.subr.mxu0 %v479
    %1449 = vmatpush1.msra.mxu0 %v478
    %1450 = vmatprep.subr.mxu0 %v483
    %1451 = vmatpush1.msra.mxu0 %v482
    %1452 = vmatprep.subr.mxu0 %v487
    %1453 = vmatpush1.msra.mxu0 %v486
    %1454 = vmatprep.subr.mxu0 %v491
    %1455 = vmatpush1.msra.mxu0 %v490
    %1456 = vmatprep.subr.mxu0 %v495
    %1457 = vmatpush1.msra.mxu0 %v494
    %1458 = vmatprep.subr.mxu0 %v499
    %1459 = vmatpush1.msra.mxu0 %v498
    %1460 = vmatprep.subr.mxu0 %v503
    %1461 = vmatpush1.msra.mxu0 %v502
    %1462 = vmatprep.subr.mxu0 0.0
    %1463 = vmatpush1.msra.mxu0 0.0
    %1464 = vmatprep.subr.mxu0 0.0
    %1465 = vmatpush1.msra.mxu0 0.0
    %1466 = vmatprep.subr.mxu0 0.0
    %1467 = vmatpush1.msra.mxu0 0.0
    %1468 = vmatprep.subr.mxu0 0.0
    %1469 = vmatpush1.msra.mxu0 0.0
    %1470 = vmatprep.subr.mxu0 0.0
    %1471 = vmatpush1.msra.mxu0 0.0
    %1472 = vmatprep.subr.mxu0 0.0
    %1473 = vmatpush1.msra.mxu0 0.0
    %1474 = vmatprep.subr.mxu0 0.0
    %1475 = vmatpush1.msra.mxu0 0.0
    %1476 = vmatprep.subr.mxu0 0.0
    %1477 = vmatpush1.msra.mxu0 0.0
    %1478 = vmatprep.subr.mxu0 0.0
    %1479 = vmatpush1.msra.mxu0 0.0
    %1480 = vmatprep.subr.mxu0 0.0
    %1481 = vmatpush1.msra.mxu0 0.0
    %1482 = vmatprep.subr.mxu0 0.0
    %1483 = vmatpush1.msra.mxu0 0.0
    %1484 = vmatprep.subr.mxu0 0.0
    %1485 = vmatpush1.msra.mxu0 0.0
    %1486 = vmatprep.subr.mxu0 0.0
    %1487 = vmatpush1.msra.mxu0 0.0
    %1488 = vmatprep.subr.mxu0 0.0
    %1489 = vmatpush1.msra.mxu0 0.0
    %1490 = vmatprep.subr.mxu0 0.0
    %1491 = vmatpush1.msra.mxu0 0.0
    %1492 = vmatprep.subr.mxu0 0.0
    %1493 = vmatpush1.msra.mxu0 0.0
    %1494 = vmatprep.mubr.f32.mxu0 0.0
    %1495 = vmatmul.mubr.f32.gmra.mrb[0].mxu0 %v1352
    %v1496 = vpop.f32.mrb[0].mxu0
    %v1497 = vadd.f32 0.0, %v1496
    %v1498 = vpop.f32.mrb[0].mxu0
    %v1499 = vadd.f32 0.0, %v1498
    %1500 = vdwg.mxu0
    %v1501 = vadd.f32 %v1355, %v1426
    %v1502 = vadd.f32 %v1356, %v1428
    %v1503 = vadd.f32 %v1357, %v1497
    %v1504 = vadd.f32 %v1358, %v1499
    %v1505 = vmul.f32 %v1501, 0.5
    %v1506 = vtanh.pop %v1505
    %v1507 = vmul.f32 %v1506, 0.5
    %v1508 = vadd.f32 %v1507, 0.5
    %v1509 = vmul.f32 %v1502, 0.5
    %v1510 = vtanh.pop %v1509
    %v1511 = vmul.f32 %v1510, 0.5
    %v1512 = vadd.f32 %v1511, 0.5
    %v1513 = vtanh.pop %v1503
    %v1514 = vmul.f32 %v1504, 0.5
    %v1515 = vtanh.pop %v1514
    %v1516 = vmul.f32 %v1515, 0.5
    %v1517 = vadd.f32 %v1516, 0.5
    %v1518 = vmul.f32 %v1512, %v1350
    %v1519 = vmul.f32 %v1508, %v1513
    %v1520 = vadd.f32 %v1518, %v1519
    %v1521 = vtanh.pop %v1520
    %v1522 = vmul.f32 %v1517, %v1521
    %s1523 = scalar_lea.vmem [#allocation13], 40
    %1524 = vst [vmem:[%s1523] sm:$0xff] %v1522
    %v1525 = vld [vmem:[#allocation4 + $0xc0] sm:$0xff]
    %v1526 = vld [vmem:[#allocation4 + $0xc8] sm:$0xff]
    %v1527 = vld [vmem:[#allocation4 + $0xd0] sm:$0xff]
    %v1528 = vld [vmem:[#allocation4 + $0xd8] sm:$0xff]
    %1529 = vmatprep.subr.mxu0 %v441
    %1530 = vmatpush1.msra.mxu0 %v440
    %1531 = vmatprep.subr.mxu0 %v445
    %1532 = vmatpush1.msra.mxu0 %v444
    %1533 = vmatprep.subr.mxu0 %v449
    %1534 = vmatpush1.msra.mxu0 %v448
    %1535 = vmatprep.subr.mxu0 %v453
    %1536 = vmatpush1.msra.mxu0 %v452
    %1537 = vmatprep.subr.mxu0 %v457
    %1538 = vmatpush1.msra.mxu0 %v456
    %1539 = vmatprep.subr.mxu0 %v461
    %1540 = vmatpush1.msra.mxu0 %v460
    %1541 = vmatprep.subr.mxu0 %v465
    %1542 = vmatpush1.msra.mxu0 %v464
    %1543 = vmatprep.subr.mxu0 %v469
    %1544 = vmatpush1.msra.mxu0 %v468
    %1545 = vmatprep.subr.mxu0 %v473
    %1546 = vmatpush1.msra.mxu0 %v472
    %1547 = vmatprep.subr.mxu0 %v477
    %1548 = vmatpush1.msra.mxu0 %v476
    %1549 = vmatprep.subr.mxu0 %v481
    %1550 = vmatpush1.msra.mxu0 %v480
    %1551 = vmatprep.subr.mxu0 %v485
    %1552 = vmatpush1.msra.mxu0 %v484
    %1553 = vmatprep.subr.mxu0 %v489
    %1554 = vmatpush1.msra.mxu0 %v488
    %1555 = vmatprep.subr.mxu0 %v493
    %1556 = vmatpush1.msra.mxu0 %v492
    %1557 = vmatprep.subr.mxu0 %v497
    %1558 = vmatpush1.msra.mxu0 %v496
    %1559 = vmatprep.subr.mxu0 %v501
    %1560 = vmatpush1.msra.mxu0 %v500
    %1561 = vmatprep.subr.mxu0 0.0
    %1562 = vmatpush1.msra.mxu0 0.0
    %1563 = vmatprep.subr.mxu0 0.0
    %1564 = vmatpush1.msra.mxu0 0.0
    %1565 = vmatprep.subr.mxu0 0.0
    %1566 = vmatpush1.msra.mxu0 0.0
    %1567 = vmatprep.subr.mxu0 0.0
    %1568 = vmatpush1.msra.mxu0 0.0
    %1569 = vmatprep.subr.mxu0 0.0
    %1570 = vmatpush1.msra.mxu0 0.0
    %1571 = vmatprep.subr.mxu0 0.0
    %1572 = vmatpush1.msra.mxu0 0.0
    %1573 = vmatprep.subr.mxu0 0.0
    %1574 = vmatpush1.msra.mxu0 0.0
    %1575 = vmatprep.subr.mxu0 0.0
    %1576 = vmatpush1.msra.mxu0 0.0
    %1577 = vmatprep.subr.mxu0 0.0
    %1578 = vmatpush1.msra.mxu0 0.0
    %1579 = vmatprep.subr.mxu0 0.0
    %1580 = vmatpush1.msra.mxu0 0.0
    %1581 = vmatprep.subr.mxu0 0.0
    %1582 = vmatpush1.msra.mxu0 0.0
    %1583 = vmatprep.subr.mxu0 0.0
    %1584 = vmatpush1.msra.mxu0 0.0
    %1585 = vmatprep.subr.mxu0 0.0
    %1586 = vmatpush1.msra.mxu0 0.0
    %1587 = vmatprep.subr.mxu0 0.0
    %1588 = vmatpush1.msra.mxu0 0.0
    %1589 = vmatprep.subr.mxu0 0.0
    %1590 = vmatpush1.msra.mxu0 0.0
    %1591 = vmatprep.subr.mxu0 0.0
    %1592 = vmatpush1.msra.mxu0 0.0
    %1593 = vmatprep.mubr.f32.mxu0 0.0
    %1594 = vmatmul.mubr.f32.gmra.mrb[0].mxu0 %v1522
    %v1595 = vpop.f32.mrb[0].mxu0
    %v1596 = vadd.f32 0.0, %v1595
    %v1597 = vpop.f32.mrb[0].mxu0
    %v1598 = vadd.f32 0.0, %v1597
    %1599 = vdwg.mxu0
    %1600 = vmatprep.subr.mxu0 %v443
    %1601 = vmatpush1.msra.mxu0 %v442
    %1602 = vmatprep.subr.mxu0 %v447
    %1603 = vmatpush1.msra.mxu0 %v446
    %1604 = vmatprep.subr.mxu0 %v451
    %1605 = vmatpush1.msra.mxu0 %v450
    %1606 = vmatprep.subr.mxu0 %v455
    %1607 = vmatpush1.msra.mxu0 %v454
    %1608 = vmatprep.subr.mxu0 %v459
    %1609 = vmatpush1.msra.mxu0 %v458
    %1610 = vmatprep.subr.mxu0 %v463
    %1611 = vmatpush1.msra.mxu0 %v462
    %1612 = vmatprep.subr.mxu0 %v467
    %1613 = vmatpush1.msra.mxu0 %v466
    %1614 = vmatprep.subr.mxu0 %v471
    %1615 = vmatpush1.msra.mxu0 %v470
    %1616 = vmatprep.subr.mxu0 %v475
    %1617 = vmatpush1.msra.mxu0 %v474
    %1618 = vmatprep.subr.mxu0 %v479
    %1619 = vmatpush1.msra.mxu0 %v478
    %1620 = vmatprep.subr.mxu0 %v483
    %1621 = vmatpush1.msra.mxu0 %v482
    %1622 = vmatprep.subr.mxu0 %v487
    %1623 = vmatpush1.msra.mxu0 %v486
    %1624 = vmatprep.subr.mxu0 %v491
    %1625 = vmatpush1.msra.mxu0 %v490
    %1626 = vmatprep.subr.mxu0 %v495
    %1627 = vmatpush1.msra.mxu0 %v494
    %1628 = vmatprep.subr.mxu0 %v499
    %1629 = vmatpush1.msra.mxu0 %v498
    %1630 = vmatprep.subr.mxu0 %v503
    %1631 = vmatpush1.msra.mxu0 %v502
    %1632 = vmatprep.subr.mxu0 0.0
    %1633 = vmatpush1.msra.mxu0 0.0
    %1634 = vmatprep.subr.mxu0 0.0
    %1635 = vmatpush1.msra.mxu0 0.0
    %1636 = vmatprep.subr.mxu0 0.0
    %1637 = vmatpush1.msra.mxu0 0.0
    %1638 = vmatprep.subr.mxu0 0.0
    %1639 = vmatpush1.msra.mxu0 0.0
    %1640 = vmatprep.subr.mxu0 0.0
    %1641 = vmatpush1.msra.mxu0 0.0
    %1642 = vmatprep.subr.mxu0 0.0
    %1643 = vmatpush1.msra.mxu0 0.0
    %1644 = vmatprep.subr.mxu0 0.0
    %1645 = vmatpush1.msra.mxu0 0.0
    %1646 = vmatprep.subr.mxu0 0.0
    %1647 = vmatpush1.msra.mxu0 0.0
    %1648 = vmatprep.subr.mxu0 0.0
    %1649 = vmatpush1.msra.mxu0 0.0
    %1650 = vmatprep.subr.mxu0 0.0
    %1651 = vmatpush1.msra.mxu0 0.0
    %1652 = vmatprep.subr.mxu0 0.0
    %1653 = vmatpush1.msra.mxu0 0.0
    %1654 = vmatprep.subr.mxu0 0.0
    %1655 = vmatpush1.msra.mxu0 0.0
    %1656 = vmatprep.subr.mxu0 0.0
    %1657 = vmatpush1.msra.mxu0 0.0
    %1658 = vmatprep.subr.mxu0 0.0
    %1659 = vmatpush1.msra.mxu0 0.0
    %1660 = vmatprep.subr.mxu0 0.0
    %1661 = vmatpush1.msra.mxu0 0.0
    %1662 = vmatprep.subr.mxu0 0.0
    %1663 = vmatpush1.msra.mxu0 0.0
    %1664 = vmatprep.mubr.f32.mxu0 0.0
    %1665 = vmatmul.mubr.f32.gmra.mrb[0].mxu0 %v1522
    %v1666 = vpop.f32.mrb[0].mxu0
    %v1667 = vadd.f32 0.0, %v1666
    %v1668 = vpop.f32.mrb[0].mxu0
    %v1669 = vadd.f32 0.0, %v1668
    %1670 = vdwg.mxu0
    %v1671 = vadd.f32 %v1525, %v1596
    %v1672 = vadd.f32 %v1526, %v1598
    %v1673 = vadd.f32 %v1527, %v1667
    %v1674 = vadd.f32 %v1528, %v1669
    %v1675 = vmul.f32 %v1671, 0.5
    %v1676 = vtanh.pop %v1675
    %v1677 = vmul.f32 %v1676, 0.5
    %v1678 = vadd.f32 %v1677, 0.5
    %v1679 = vmul.f32 %v1672, 0.5
    %v1680 = vtanh.pop %v1679
    %v1681 = vmul.f32 %v1680, 0.5
    %v1682 = vadd.f32 %v1681, 0.5
    %v1683 = vtanh.pop %v1673
    %v1684 = vmul.f32 %v1674, 0.5
    %v1685 = vtanh.pop %v1684
    %v1686 = vmul.f32 %v1685, 0.5
    %v1687 = vadd.f32 %v1686, 0.5
    %v1688 = vmul.f32 %v1682, %v1520
    %v1689 = vmul.f32 %v1678, %v1683
    %v1690 = vadd.f32 %v1688, %v1689
    %v1691 = vtanh.pop %v1690
    %v1692 = vmul.f32 %v1687, %v1691
    %s1693 = scalar_lea.vmem [#allocation13], 48
    %1694 = vst [vmem:[%s1693] sm:$0xff] %v1692
    %v1695 = vld [vmem:[#allocation4 + $0xe0] sm:$0xff]
    %v1696 = vld [vmem:[#allocation4 + $0xe8] sm:$0xff]
    %v1697 = vld [vmem:[#allocation4 + $0xf0] sm:$0xff]
    %v1698 = vld [vmem:[#allocation4 + $0xf8] sm:$0xff]
    %1699 = vmatprep.subr.mxu0 %v441
    %1700 = vmatpush1.msra.mxu0 %v440
    %1701 = vmatprep.subr.mxu0 %v445
    %1702 = vmatpush1.msra.mxu0 %v444
    %1703 = vmatprep.subr.mxu0 %v449
    %1704 = vmatpush1.msra.mxu0 %v448
    %1705 = vmatprep.subr.mxu0 %v453
    %1706 = vmatpush1.msra.mxu0 %v452
    %1707 = vmatprep.subr.mxu0 %v457
    %1708 = vmatpush1.msra.mxu0 %v456
    %1709 = vmatprep.subr.mxu0 %v461
    %1710 = vmatpush1.msra.mxu0 %v460
    %1711 = vmatprep.subr.mxu0 %v465
    %1712 = vmatpush1.msra.mxu0 %v464
    %1713 = vmatprep.subr.mxu0 %v469
    %1714 = vmatpush1.msra.mxu0 %v468
    %1715 = vmatprep.subr.mxu0 %v473
    %1716 = vmatpush1.msra.mxu0 %v472
    %1717 = vmatprep.subr.mxu0 %v477
    %1718 = vmatpush1.msra.mxu0 %v476
    %1719 = vmatprep.subr.mxu0 %v481
    %1720 = vmatpush1.msra.mxu0 %v480
    %1721 = vmatprep.subr.mxu0 %v485
    %1722 = vmatpush1.msra.mxu0 %v484
    %1723 = vmatprep.subr.mxu0 %v489
    %1724 = vmatpush1.msra.mxu0 %v488
    %1725 = vmatprep.subr.mxu0 %v493
    %1726 = vmatpush1.msra.mxu0 %v492
    %1727 = vmatprep.subr.mxu0 %v497
    %1728 = vmatpush1.msra.mxu0 %v496
    %1729 = vmatprep.subr.mxu0 %v501
    %1730 = vmatpush1.msra.mxu0 %v500
    %1731 = vmatprep.subr.mxu0 0.0
    %1732 = vmatpush1.msra.mxu0 0.0
    %1733 = vmatprep.subr.mxu0 0.0
    %1734 = vmatpush1.msra.mxu0 0.0
    %1735 = vmatprep.subr.mxu0 0.0
    %1736 = vmatpush1.msra.mxu0 0.0
    %1737 = vmatprep.subr.mxu0 0.0
    %1738 = vmatpush1.msra.mxu0 0.0
    %1739 = vmatprep.subr.mxu0 0.0
    %1740 = vmatpush1.msra.mxu0 0.0
    %1741 = vmatprep.subr.mxu0 0.0
    %1742 = vmatpush1.msra.mxu0 0.0
    %1743 = vmatprep.subr.mxu0 0.0
    %1744 = vmatpush1.msra.mxu0 0.0
    %1745 = vmatprep.subr.mxu0 0.0
    %1746 = vmatpush1.msra.mxu0 0.0
    %1747 = vmatprep.subr.mxu0 0.0
    %1748 = vmatpush1.msra.mxu0 0.0
    %1749 = vmatprep.subr.mxu0 0.0
    %1750 = vmatpush1.msra.mxu0 0.0
    %1751 = vmatprep.subr.mxu0 0.0
    %1752 = vmatpush1.msra.mxu0 0.0
    %1753 = vmatprep.subr.mxu0 0.0
    %1754 = vmatpush1.msra.mxu0 0.0
    %1755 = vmatprep.subr.mxu0 0.0
    %1756 = vmatpush1.msra.mxu0 0.0
    %1757 = vmatprep.subr.mxu0 0.0
    %1758 = vmatpush1.msra.mxu0 0.0
    %1759 = vmatprep.subr.mxu0 0.0
    %1760 = vmatpush1.msra.mxu0 0.0
    %1761 = vmatprep.subr.mxu0 0.0
    %1762 = vmatpush1.msra.mxu0 0.0
    %1763 = vmatprep.mubr.f32.mxu0 0.0
    %1764 = vmatmul.mubr.f32.gmra.mrb[0].mxu0 %v1692
    %v1765 = vpop.f32.mrb[0].mxu0
    %v1766 = vadd.f32 0.0, %v1765
    %v1767 = vpop.f32.mrb[0].mxu0
    %v1768 = vadd.f32 0.0, %v1767
    %1769 = vdwg.mxu0
    %1770 = vmatprep.subr.mxu0 %v443
    %1771 = vmatpush1.msra.mxu0 %v442
    %1772 = vmatprep.subr.mxu0 %v447
    %1773 = vmatpush1.msra.mxu0 %v446
    %1774 = vmatprep.subr.mxu0 %v451
    %1775 = vmatpush1.msra.mxu0 %v450
    %1776 = vmatprep.subr.mxu0 %v455
    %1777 = vmatpush1.msra.mxu0 %v454
    %1778 = vmatprep.subr.mxu0 %v459
    %1779 = vmatpush1.msra.mxu0 %v458
    %1780 = vmatprep.subr.mxu0 %v463
    %1781 = vmatpush1.msra.mxu0 %v462
    %1782 = vmatprep.subr.mxu0 %v467
    %1783 = vmatpush1.msra.mxu0 %v466
    %1784 = vmatprep.subr.mxu0 %v471
    %1785 = vmatpush1.msra.mxu0 %v470
    %1786 = vmatprep.subr.mxu0 %v475
    %1787 = vmatpush1.msra.mxu0 %v474
    %1788 = vmatprep.subr.mxu0 %v479
    %1789 = vmatpush1.msra.mxu0 %v478
    %1790 = vmatprep.subr.mxu0 %v483
    %1791 = vmatpush1.msra.mxu0 %v482
    %1792 = vmatprep.subr.mxu0 %v487
    %1793 = vmatpush1.msra.mxu0 %v486
    %1794 = vmatprep.subr.mxu0 %v491
    %1795 = vmatpush1.msra.mxu0 %v490
    %1796 = vmatprep.subr.mxu0 %v495
    %1797 = vmatpush1.msra.mxu0 %v494
    %1798 = vmatprep.subr.mxu0 %v499
    %1799 = vmatpush1.msra.mxu0 %v498
    %1800 = vmatprep.subr.mxu0 %v503
    %1801 = vmatpush1.msra.mxu0 %v502
    %1802 = vmatprep.subr.mxu0 0.0
    %1803 = vmatpush1.msra.mxu0 0.0
    %1804 = vmatprep.subr.mxu0 0.0
    %1805 = vmatpush1.msra.mxu0 0.0
    %1806 = vmatprep.subr.mxu0 0.0
    %1807 = vmatpush1.msra.mxu0 0.0
    %1808 = vmatprep.subr.mxu0 0.0
    %1809 = vmatpush1.msra.mxu0 0.0
    %1810 = vmatprep.subr.mxu0 0.0
    %1811 = vmatpush1.msra.mxu0 0.0
    %1812 = vmatprep.subr.mxu0 0.0
    %1813 = vmatpush1.msra.mxu0 0.0
    %1814 = vmatprep.subr.mxu0 0.0
    %1815 = vmatpush1.msra.mxu0 0.0
    %1816 = vmatprep.subr.mxu0 0.0
    %1817 = vmatpush1.msra.mxu0 0.0
    %1818 = vmatprep.subr.mxu0 0.0
    %1819 = vmatpush1.msra.mxu0 0.0
    %1820 = vmatprep.subr.mxu0 0.0
    %1821 = vmatpush1.msra.mxu0 0.0
    %1822 = vmatprep.subr.mxu0 0.0
    %1823 = vmatpush1.msra.mxu0 0.0
    %1824 = vmatprep.subr.mxu0 0.0
    %1825 = vmatpush1.msra.mxu0 0.0
    %1826 = vmatprep.subr.mxu0 0.0
    %1827 = vmatpush1.msra.mxu0 0.0
    %1828 = vmatprep.subr.mxu0 0.0
    %1829 = vmatpush1.msra.mxu0 0.0
    %1830 = vmatprep.subr.mxu0 0.0
    %1831 = vmatpush1.msra.mxu0 0.0
    %1832 = vmatprep.subr.mxu0 0.0
    %1833 = vmatpush1.msra.mxu0 0.0
    %1834 = vmatprep.mubr.f32.mxu0 0.0
    %1835 = vmatmul.mubr.f32.gmra.mrb[0].mxu0 %v1692
    %v1836 = vpop.f32.mrb[0].mxu0
    %v1837 = vadd.f32 0.0, %v1836
    %v1838 = vpop.f32.mrb[0].mxu0
    %v1839 = vadd.f32 0.0, %v1838
    %1840 = vdwg.mxu0
    %v1841 = vadd.f32 %v1695, %v1766
    %v1842 = vadd.f32 %v1696, %v1768
    %v1843 = vadd.f32 %v1697, %v1837
    %v1844 = vadd.f32 %v1698, %v1839
    %v1845 = vmul.f32 %v1841, 0.5
    %v1846 = vtanh.pop %v1845
    %v1847 = vmul.f32 %v1846, 0.5
    %v1848 = vadd.f32 %v1847, 0.5
    %v1849 = vmul.f32 %v1842, 0.5
    %v1850 = vtanh.pop %v1849
    %v1851 = vmul.f32 %v1850, 0.5
    %v1852 = vadd.f32 %v1851, 0.5
    %v1853 = vtanh.pop %v1843
    %v1854 = vmul.f32 %v1844, 0.5
    %v1855 = vtanh.pop %v1854
    %v1856 = vmul.f32 %v1855, 0.5
    %v1857 = vadd.f32 %v1856, 0.5
    %v1858 = vmul.f32 %v1852, %v1690
    %v1859 = vmul.f32 %v1848, %v1853
    %v1860 = vadd.f32 %v1858, %v1859
    %v1861 = vtanh.pop %v1860
    %v1862 = vmul.f32 %v1857, %v1861
    %s1863 = scalar_lea.vmem [#allocation13], 56
    %1864 = vst [vmem:[%s1863] sm:$0xff] %v1862
    %1865 = vst [vmem:[#allocation2] sm:$0xff] %v1862
    %1866 = vst [vmem:[#allocation3] sm:$0xff] %v1860
    // Predicated region
    $region46: #{tpu_custom_call.1} parent=1 // pred_check
      %p1867 = pneg %p80
    $region47: #{tpu_custom_call.1} parent=1 // pred_check_branch
      %1869 = sbr.rel (%p1867) target = $region49
    $region48: #{tpu_custom_call.1} parent=1 // pred_region
      %1870 = vst [vmem:[#allocation14] sm:$0xff] %v1860
    $region49: #{tpu_custom_call.1} parent=1 // pred_fallthru
      _
    // Predicated region
    $region50: #{tpu_custom_call.1} parent=1 // pred_check
      _
    $region51: #{tpu_custom_call.1} parent=1 // pred_check_branch
      %1872 = sbr.rel (0) target = $region53
    $region52: #{tpu_custom_call.1} parent=1 // pred_region
      %s1874 = ssub.s32 1024, 1024
      %1875 = vsyncadd [#allocation7], %s1874
      %s1876 = sshll.u32 [#allocation13], 4
      %s1877 = int_to_ptr.vmem [resolvable:$true] %s1876
      %1882 = dma.vmem_to_hbm [thread:$0]  %s1877, 1024, %s6, [#allocation7], 128, 128, 8
    $region53: #{tpu_custom_call.1} parent=1 // pred_fallthru
      _
    // Predicated region
    $region54: #{tpu_custom_call.1} parent=1 // pred_check
      _
    $region55: #{tpu_custom_call.1} parent=1 // pred_check_branch
      %1884 = sbr.rel (0) target = $region57
    $region56: #{tpu_custom_call.1} parent=1 // pred_region
      %s1886 = ssub.s32 128, 128
      %1887 = vsyncadd [#allocation15], %s1886
      %s1889 = sshll.u32 [#allocation14], 4
      %s1890 = int_to_ptr.vmem [resolvable:$true] %s1889
      %1892 = dma.vmem_to_hbm [thread:$0]  %s1890, 128, %s7, [#allocation15]
    $region57: #{tpu_custom_call.1} parent=1 // pred_fallthru
      _
    // Predicated region
    $region58: #{tpu_custom_call.1} parent=1 // pred_check
      _
    $region59: #{tpu_custom_call.1} parent=1 // pred_check_branch
      %1894 = sbr.rel (0) target = $region61
    $region60: #{tpu_custom_call.1} parent=1 // pred_region
      %1895 = dma.done [#allocation7], 1024
    $region61: #{tpu_custom_call.1} parent=1 // pred_fallthru
      _
    // Predicated region
    $region62: #{tpu_custom_call.1} parent=1 // pred_check
      _
    $region63: #{tpu_custom_call.1} parent=1 // pred_check_branch
      %1897 = sbr.rel (0) target = $region65
    $region64: #{tpu_custom_call.1} parent=1 // pred_region
      %1898 = dma.done [#allocation15], 128
    $region65: #{tpu_custom_call.1} parent=1 // pred_fallthru
      _
    %1899 = vsyncpa [#allocation6], 1
    %1900 = vsyncpa [#allocation9], 1
    %1901 = vsyncpa [#allocation12], 1
    %1902 = vsyncpa [#allocation7], 1
    %1903 = vsyncpa [#allocation15], 1

</llo_original>
